<compile_context>
chip_gen: v5e
topology: v5e:2x2
jax: 0.10.0
libtpu: 0.0.40
codegen_flags: <defaults>
</compile_context>

<pallas_src>
import jax
import jax.numpy as jnp
from jax import lax
from jax.experimental import pallas as pl
from jax.experimental.pallas import tpu as pltpu


def _bilstm_kernel(
    # inputs
    xaug_ref,   # (T, 2E)  bf16  [x | reverse(x)]
    wih_ref,    # (2E, 8H) bf16  block-diag, gate-grouped columns
    b_ref,      # (1, 8H)  f32   gate-grouped fused bias (b_ih + b_hh per dir)
    whh_ref,    # (2H, 8H) bf16  block-diag, gate-grouped columns
    h0_ref,     # (1, 2H)  f32   [h0_f | h0_b]
    c0_ref,     # (1, 2H)  f32   [c0_f | c0_b]
    wout_ref,   # (2H, L)  f32   Linear weight^T
    bout_ref,   # (1, L)   f32   Linear bias
    # outputs
    out_ref,    # (T, L)   f32   logits
    # scratch
    xw_ref,     # (T, 8H)  f32   hoisted input projection (both directions)
    hseq_ref,   # (T, 2H)  f32   per-step fused hidden state [h_f(s) | h_b(T-1-s)]
):
    T = xaug_ref.shape[0]
    H2 = whh_ref.shape[0]          # 2H
    H = H2 // 2
    G = 2 * H                      # fused gate group width

    # ---- hoisted input projection: one bf16 MXU matmul, f32 acc, bias folded ----
    xw_ref[...] = (
        jnp.dot(xaug_ref[...], wih_ref[...], preferred_element_type=jnp.float32)
        + b_ref[...]
    )

    h = h0_ref[...]                # (1, 2H) f32, carries [h_f | h_b]
    c = c0_ref[...]                # (1, 2H) f32, carries [c_f | c_b]

    # ---- fused fwd/bwd recurrence, fully unrolled (T is small & static) ----
    for s in range(T):
        # re-read W_hh from VMEM each step (don't pin 8+ vregs across the unroll)
        hg = jnp.dot(
            h.astype(jnp.bfloat16), whh_ref[...],
            preferred_element_type=jnp.float32,
        )                                               # (1, 8H)
        gates = hg + xw_ref[s:s + 1, :]                 # one full-width add
        i_g = jax.nn.sigmoid(gates[:, 0 * G:1 * G])     # (1, 2H) fused fwd|bwd
        f_g = jax.nn.sigmoid(gates[:, 1 * G:2 * G])
        g_g = jnp.tanh(gates[:, 2 * G:3 * G])
        o_g = jax.nn.sigmoid(gates[:, 3 * G:4 * G])
        c = f_g * c + i_g * g_g
        h = o_g * jnp.tanh(c)
        hseq_ref[s:s + 1, :] = h                        # one lane-dense 2H store

    # ---- undo backward-direction time reversal once, then split projection ----
    rr = lax.broadcasted_iota(jnp.int32, (T, T), 0)
    cc = lax.broadcasted_iota(jnp.int32, (T, T), 1)
    rev = (rr + cc == T - 1).astype(jnp.float32)        # anti-diagonal permutation

    hs = hseq_ref[...]
    out_f = jnp.dot(hs[:, :H], wout_ref[:H, :], preferred_element_type=jnp.float32)
    out_b = jnp.dot(hs[:, H:], wout_ref[H:, :], preferred_element_type=jnp.float32)
    out_ref[...] = (
        out_f
        + jnp.dot(rev, out_b, preferred_element_type=jnp.float32)
        + bout_ref[...]
    )


# ----------------------- parameter packing (one-time) ---------------------- #

def _pack_gate_blockdiag(w_f, w_b, H):
    """w_f:(Kf,4H), w_b:(Kb,4H) -> (Kf+Kb, 8H) block-diagonal with gate-grouped
    columns [i_f i_b | f_f f_b | g_f g_b | o_f o_b]; off-blocks are exact zeros."""
    Kf, Kb = w_f.shape[0], w_b.shape[0]
    out = jnp.zeros((Kf + Kb, 8 * H), jnp.float32)
    for g in range(4):
        out = out.at[:Kf, (2 * g) * H:(2 * g + 1) * H].set(w_f[:, g * H:(g + 1) * H])
        out = out.at[Kf:, (2 * g + 1) * H:(2 * g + 2) * H].set(w_b[:, g * H:(g + 1) * H])
    return out


def _pack_gate_bias(b_f, b_b, H):
    out = jnp.zeros((1, 8 * H), jnp.float32)
    for g in range(4):
        out = out.at[:, (2 * g) * H:(2 * g + 1) * H].set(b_f[:, g * H:(g + 1) * H])
        out = out.at[:, (2 * g + 1) * H:(2 * g + 2) * H].set(b_b[:, g * H:(g + 1) * H])
    return out


def pack_params(params, h0, c0):
    """Pack/interleave the LSTM weights once, outside the per-call path."""
    H = params["whh_f"].shape[0]
    return {
        "wih": _pack_gate_blockdiag(params["wih_f"], params["wih_b"], H).astype(jnp.bfloat16),
        "whh": _pack_gate_blockdiag(params["whh_f"], params["whh_b"], H).astype(jnp.bfloat16),
        "b":   _pack_gate_bias(params["b_f"], params["b_b"], H),
        "h0":  jnp.concatenate([h0[0], h0[1]], axis=1),   # (1, 2H)
        "c0":  jnp.concatenate([c0[0], c0[1]], axis=1),   # (1, 2H)
        "wout": params["wout"],
        "bout": params["bout"],
    }


@jax.jit
def bilstm_forward(x_emb, packed):
    """x_emb: (T, E) float32 embeddings.  Returns (T, L) logits."""
    T, E = x_emb.shape
    H = packed["whh"].shape[0] // 2
    L = packed["wout"].shape[1]

    # [x | reverse(x)] so one matmul against the block-diag W_ih aligns
    # fwd(t=s) and bwd(t=T-1-s) contributions on the same row.
    x_aug = jnp.concatenate([x_emb, x_emb[::-1]], axis=1).astype(jnp.bfloat16)

    vmem = pl.BlockSpec(memory_space=pltpu.MemorySpace.VMEM)

    # TODO(synk): if T/H are scaled up, tile the hoisted projection over T
    # (grid / emit_pipeline) and set vmem_limit_bytes; trivially fits VMEM here.
    return pl.pallas_call(
        _bilstm_kernel,
        out_shape=jax.ShapeDtypeStruct((T, L), jnp.float32),
        in_specs=[vmem] * 8,
        out_specs=vmem,
        scratch_shapes=[
            pltpu.VMEM((T, 8 * H), jnp.float32),   # xw (hoisted input projection)
            pltpu.VMEM((T, 2 * H), jnp.float32),   # hseq (fused hidden sequence)
        ],
    )(
        x_aug, packed["wih"], packed["b"], packed["whh"],
        packed["h0"], packed["c0"], packed["wout"], packed["bout"],
    )


# ------------------------- pure-JAX f32 reference -------------------------- #

def _lstm_dir_ref(x, wih, whh, b, h0, c0, reverse):
    T = x.shape[0]
    H = h0.shape[1]
    order = range(T - 1, -1, -1) if reverse else range(T)
    h, c = h0, c0
    outs = [None] * T
    for t in order:
        gates = x[t:t + 1] @ wih + h @ whh + b
        i_g = jax.nn.sigmoid(gates[:, 0 * H:1 * H])
        f_g = jax.nn.sigmoid(gates[:, 1 * H:2 * H])
        g_g = jnp.tanh(gates[:, 2 * H:3 * H])
        o_g = jax.nn.sigmoid(gates[:, 3 * H:4 * H])
        c = f_g * c + i_g * g_g
        h = o_g * jnp.tanh(c)
        outs[t] = h
    return jnp.concatenate(outs, axis=0)


def bilstm_reference(x_emb, params, h0, c0):
    hf = _lstm_dir_ref(x_emb, params["wih_f"], params["whh_f"], params["b_f"],
                       h0[0], c0[0], reverse=False)
    hb = _lstm_dir_ref(x_emb, params["wih_b"], params["whh_b"], params["b_b"],
                       h0[1], c0[1], reverse=True)
    hcat = jnp.concatenate([hf, hb], axis=1)
    return hcat @ params["wout"] + params["bout"]


# --------------------------------- main ------------------------------------ #

if __name__ == "__main__":
    # Small shapes consistent with the module's forward (batch is hardcoded to 1).
    VOCAB = 50
    E = 16    # embedding_dim
    H = 32    # hidden_dim
    L = 8     # label_size
    T = 8     # sequence length

    key = jax.random.PRNGKey(0)
    keys = jax.random.split(key, 12)
    s = 1.0 / jnp.sqrt(H)

    emb_table = jax.random.normal(keys[0], (VOCAB, E), jnp.float32)

    params = {
        # forward direction LSTM weights (stored transposed: x @ W)
        "wih_f": jax.random.uniform(keys[1], (E, 4 * H), jnp.float32, -s, s),
        "whh_f": jax.random.uniform(keys[2], (H, 4 * H), jnp.float32, -s, s),
        "b_f":   jax.random.uniform(keys[3], (1, 4 * H), jnp.float32, -s, s),
        # backward direction
        "wih_b": jax.random.uniform(keys[4], (E, 4 * H), jnp.float32, -s, s),
        "whh_b": jax.random.uniform(keys[5], (H, 4 * H), jnp.float32, -s, s),
        "b_b":   jax.random.uniform(keys[6], (1, 4 * H), jnp.float32, -s, s),
        # output Linear (2H -> L), stored transposed
        "wout":  jax.random.uniform(keys[7], (2 * H, L), jnp.float32, -s, s),
        "bout":  jax.random.uniform(keys[8], (1, L), jnp.float32, -s, s),
    }

    # init_hidden: randn (2, 1, H) for h and c (dir 0 = forward, dir 1 = backward)
    h0 = jax.random.normal(keys[9], (2, 1, H), jnp.float32)
    c0 = jax.random.normal(keys[10], (2, 1, H), jnp.float32)

    # token sequence + embedding lookup (glue, outside the kernel)
    tokens = jax.random.randint(keys[11], (T,), 0, VOCAB)
    x_emb = jnp.take(emb_table, tokens, axis=0)  # (T, E)

    packed = pack_params(params, h0, c0)         # one-time parameter packing
    out = bilstm_forward(x_emb, packed)
    out = jax.block_until_ready(out)

    ref = bilstm_reference(x_emb, params, h0, c0)
    assert out.shape == (T, L)
    # bf16 MXU operands vs f32 reference -> relaxed tolerance.
    max_err = jnp.max(jnp.abs(out - ref))
    assert jnp.allclose(out, ref, atol=1e-1, rtol=1e-1), f"max abs err = {max_err}"

    print("KERNEL_OK")
</pallas_src>

<mosaic_0001>
module attributes {stable_mosaic.version = 11 : i64} {
  func.func @_bilstm_kernel(%arg0: memref<8x32xbf16, #tpu.memory_space<vmem>>, %arg1: memref<32x256xbf16, #tpu.memory_space<vmem>>, %arg2: memref<1x256xf32, #tpu.memory_space<vmem>>, %arg3: memref<64x256xbf16, #tpu.memory_space<vmem>>, %arg4: memref<1x64xf32, #tpu.memory_space<vmem>>, %arg5: memref<1x64xf32, #tpu.memory_space<vmem>>, %arg6: memref<64x8xf32, #tpu.memory_space<vmem>>, %arg7: memref<1x8xf32, #tpu.memory_space<vmem>>, %arg8: memref<8x8xf32, #tpu.memory_space<vmem>>, %arg9: memref<8x256xf32, #tpu.memory_space<vmem>>, %arg10: memref<8x64xf32, #tpu.memory_space<vmem>>) attributes {dimension_semantics = [], scalar_prefetch = 0 : i64, scratch_operands = 2 : i64, tpu.core_type = #tpu.core_type<tc>} {
    %c0 = arith.constant 0 : index
    %c0_0 = arith.constant 0 : index
    %0 = vector.load %arg0[%c0, %c0_0] : memref<8x32xbf16, #tpu.memory_space<vmem>>, vector<8x32xbf16>
    %c0_1 = arith.constant 0 : index
    %c0_2 = arith.constant 0 : index
    %1 = vector.load %arg1[%c0_1, %c0_2] : memref<32x256xbf16, #tpu.memory_space<vmem>>, vector<32x256xbf16>
    %cst = arith.constant dense<0.000000e+00> : vector<8x256xf32>
    %2 = tpu.matmul %0, %1, %cst {dimension_numbers = #tpu.dot_dimension_numbers<[1], [0], [0], [1], [0, 0, 1, 1], [], []>} : vector<8x32xbf16>, vector<32x256xbf16>, vector<8x256xf32> -> vector<8x256xf32>
    %c0_3 = arith.constant 0 : index
    %c0_4 = arith.constant 0 : index
    %3 = vector.load %arg2[%c0_3, %c0_4] : memref<1x256xf32, #tpu.memory_space<vmem>>, vector<1x256xf32>
    %4 = vector.broadcast %3 : vector<1x256xf32> to vector<8x256xf32>
    %5 = arith.addf %2, %4 : vector<8x256xf32>
    %c0_5 = arith.constant 0 : index
    %c0_6 = arith.constant 0 : index
    %6 = vector.load %arg9[%c0_5, %c0_6] : memref<8x256xf32, #tpu.memory_space<vmem>>, vector<8x256xf32>
    tpu.vector_store %arg9[%c0_5, %c0_6], %5 {strides = array<i32>} : memref<8x256xf32, #tpu.memory_space<vmem>>, vector<8x256xf32>,
    %c0_7 = arith.constant 0 : index
    %c0_8 = arith.constant 0 : index
    %7 = vector.load %arg4[%c0_7, %c0_8] : memref<1x64xf32, #tpu.memory_space<vmem>>, vector<1x64xf32>
    %c0_9 = arith.constant 0 : index
    %c0_10 = arith.constant 0 : index
    %8 = vector.load %arg5[%c0_9, %c0_10] : memref<1x64xf32, #tpu.memory_space<vmem>>, vector<1x64xf32>
    %9 = arith.truncf %7 : vector<1x64xf32> to vector<1x64xbf16>
    %c0_11 = arith.constant 0 : index
    %c0_12 = arith.constant 0 : index
    %10 = vector.load %arg3[%c0_11, %c0_12] : memref<64x256xbf16, #tpu.memory_space<vmem>>, vector<64x256xbf16>
    %cst_13 = arith.constant dense<0.000000e+00> : vector<1x256xf32>
    %11 = tpu.matmul %9, %10, %cst_13 {dimension_numbers = #tpu.dot_dimension_numbers<[1], [0], [0], [1], [0, 0, 1, 1], [], []>} : vector<1x64xbf16>, vector<64x256xbf16>, vector<1x256xf32> -> vector<1x256xf32>
    %c0_14 = arith.constant 0 : index
    %c0_15 = arith.constant 0 : index
    %12 = vector.load %arg9[%c0_14, %c0_15] : memref<8x256xf32, #tpu.memory_space<vmem>>, vector<1x256xf32>
    %13 = arith.addf %11, %12 : vector<1x256xf32>
    %14 = vector.extract_strided_slice %13 {offsets = [0, 0], sizes = [1, 64], strides = [1, 1]} : vector<1x256xf32> to vector<1x64xf32>
    %15 = arith.negf %14 : vector<1x64xf32>
    %16 = math.exp %15 : vector<1x64xf32>
    %cst_16 = arith.constant 1.000000e+00 : f32
    %17 = vector.broadcast %cst_16 : f32 to vector<1x64xf32>
    %18 = arith.addf %17, %16 : vector<1x64xf32>
    %19 = arith.divf %17, %18 : vector<1x64xf32>
    %20 = vector.extract_strided_slice %13 {offsets = [0, 64], sizes = [1, 64], strides = [1, 1]} : vector<1x256xf32> to vector<1x64xf32>
    %21 = arith.negf %20 : vector<1x64xf32>
    %22 = math.exp %21 : vector<1x64xf32>
    %cst_17 = arith.constant 1.000000e+00 : f32
    %23 = vector.broadcast %cst_17 : f32 to vector<1x64xf32>
    %24 = arith.addf %23, %22 : vector<1x64xf32>
    %25 = arith.divf %23, %24 : vector<1x64xf32>
    %26 = vector.extract_strided_slice %13 {offsets = [0, 128], sizes = [1, 64], strides = [1, 1]} : vector<1x256xf32> to vector<1x64xf32>
    %27 = math.tanh %26 : vector<1x64xf32>
    %28 = vector.extract_strided_slice %13 {offsets = [0, 192], sizes = [1, 64], strides = [1, 1]} : vector<1x256xf32> to vector<1x64xf32>
    %29 = arith.negf %28 : vector<1x64xf32>
    %30 = math.exp %29 : vector<1x64xf32>
    %cst_18 = arith.constant 1.000000e+00 : f32
    %31 = vector.broadcast %cst_18 : f32 to vector<1x64xf32>
    %32 = arith.addf %31, %30 : vector<1x64xf32>
    %33 = arith.divf %31, %32 : vector<1x64xf32>
    %34 = arith.mulf %25, %8 : vector<1x64xf32>
    %35 = arith.mulf %19, %27 : vector<1x64xf32>
    %36 = arith.addf %34, %35 : vector<1x64xf32>
    %37 = math.tanh %36 : vector<1x64xf32>
    %38 = arith.mulf %33, %37 : vector<1x64xf32>
    %c0_19 = arith.constant 0 : index
    %c0_20 = arith.constant 0 : index
    %39 = vector.load %arg10[%c0_19, %c0_20] : memref<8x64xf32, #tpu.memory_space<vmem>>, vector<1x64xf32>
    tpu.vector_store %arg10[%c0_19, %c0_20], %38 {strides = array<i32>} : memref<8x64xf32, #tpu.memory_space<vmem>>, vector<1x64xf32>,
    %40 = arith.truncf %38 : vector<1x64xf32> to vector<1x64xbf16>
    %c0_21 = arith.constant 0 : index
    %c0_22 = arith.constant 0 : index
    %41 = vector.load %arg3[%c0_21, %c0_22] : memref<64x256xbf16, #tpu.memory_space<vmem>>, vector<64x256xbf16>
    %cst_23 = arith.constant dense<0.000000e+00> : vector<1x256xf32>
    %42 = tpu.matmul %40, %41, %cst_23 {dimension_numbers = #tpu.dot_dimension_numbers<[1], [0], [0], [1], [0, 0, 1, 1], [], []>} : vector<1x64xbf16>, vector<64x256xbf16>, vector<1x256xf32> -> vector<1x256xf32>
    %c1 = arith.constant 1 : index
    %c0_24 = arith.constant 0 : index
    %43 = vector.load %arg9[%c1, %c0_24] : memref<8x256xf32, #tpu.memory_space<vmem>>, vector<1x256xf32>
    %44 = arith.addf %42, %43 : vector<1x256xf32>
    %45 = vector.extract_strided_slice %44 {offsets = [0, 0], sizes = [1, 64], strides = [1, 1]} : vector<1x256xf32> to vector<1x64xf32>
    %46 = arith.negf %45 : vector<1x64xf32>
    %47 = math.exp %46 : vector<1x64xf32>
    %cst_25 = arith.constant 1.000000e+00 : f32
    %48 = vector.broadcast %cst_25 : f32 to vector<1x64xf32>
    %49 = arith.addf %48, %47 : vector<1x64xf32>
    %50 = arith.divf %48, %49 : vector<1x64xf32>
    %51 = vector.extract_strided_slice %44 {offsets = [0, 64], sizes = [1, 64], strides = [1, 1]} : vector<1x256xf32> to vector<1x64xf32>
    %52 = arith.negf %51 : vector<1x64xf32>
    %53 = math.exp %52 : vector<1x64xf32>
    %cst_26 = arith.constant 1.000000e+00 : f32
    %54 = vector.broadcast %cst_26 : f32 to vector<1x64xf32>
    %55 = arith.addf %54, %53 : vector<1x64xf32>
    %56 = arith.divf %54, %55 : vector<1x64xf32>
    %57 = vector.extract_strided_slice %44 {offsets = [0, 128], sizes = [1, 64], strides = [1, 1]} : vector<1x256xf32> to vector<1x64xf32>
    %58 = math.tanh %57 : vector<1x64xf32>
    %59 = vector.extract_strided_slice %44 {offsets = [0, 192], sizes = [1, 64], strides = [1, 1]} : vector<1x256xf32> to vector<1x64xf32>
    %60 = arith.negf %59 : vector<1x64xf32>
    %61 = math.exp %60 : vector<1x64xf32>
    %cst_27 = arith.constant 1.000000e+00 : f32
    %62 = vector.broadcast %cst_27 : f32 to vector<1x64xf32>
    %63 = arith.addf %62, %61 : vector<1x64xf32>
    %64 = arith.divf %62, %63 : vector<1x64xf32>
    %65 = arith.mulf %56, %36 : vector<1x64xf32>
    %66 = arith.mulf %50, %58 : vector<1x64xf32>
    %67 = arith.addf %65, %66 : vector<1x64xf32>
    %68 = math.tanh %67 : vector<1x64xf32>
    %69 = arith.mulf %64, %68 : vector<1x64xf32>
    %c1_28 = arith.constant 1 : index
    %c0_29 = arith.constant 0 : index
    %70 = vector.load %arg10[%c1_28, %c0_29] : memref<8x64xf32, #tpu.memory_space<vmem>>, vector<1x64xf32>
    tpu.vector_store %arg10[%c1_28, %c0_29], %69 {strides = array<i32>} : memref<8x64xf32, #tpu.memory_space<vmem>>, vector<1x64xf32>,
    %71 = arith.truncf %69 : vector<1x64xf32> to vector<1x64xbf16>
    %c0_30 = arith.constant 0 : index
    %c0_31 = arith.constant 0 : index
    %72 = vector.load %arg3[%c0_30, %c0_31] : memref<64x256xbf16, #tpu.memory_space<vmem>>, vector<64x256xbf16>
    %cst_32 = arith.constant dense<0.000000e+00> : vector<1x256xf32>
    %73 = tpu.matmul %71, %72, %cst_32 {dimension_numbers = #tpu.dot_dimension_numbers<[1], [0], [0], [1], [0, 0, 1, 1], [], []>} : vector<1x64xbf16>, vector<64x256xbf16>, vector<1x256xf32> -> vector<1x256xf32>
    %c2 = arith.constant 2 : index
    %c0_33 = arith.constant 0 : index
    %74 = vector.load %arg9[%c2, %c0_33] : memref<8x256xf32, #tpu.memory_space<vmem>>, vector<1x256xf32>
    %75 = arith.addf %73, %74 : vector<1x256xf32>
    %76 = vector.extract_strided_slice %75 {offsets = [0, 0], sizes = [1, 64], strides = [1, 1]} : vector<1x256xf32> to vector<1x64xf32>
    %77 = arith.negf %76 : vector<1x64xf32>
    %78 = math.exp %77 : vector<1x64xf32>
    %cst_34 = arith.constant 1.000000e+00 : f32
    %79 = vector.broadcast %cst_34 : f32 to vector<1x64xf32>
    %80 = arith.addf %79, %78 : vector<1x64xf32>
    %81 = arith.divf %79, %80 : vector<1x64xf32>
    %82 = vector.extract_strided_slice %75 {offsets = [0, 64], sizes = [1, 64], strides = [1, 1]} : vector<1x256xf32> to vector<1x64xf32>
    %83 = arith.negf %82 : vector<1x64xf32>
    %84 = math.exp %83 : vector<1x64xf32>
    %cst_35 = arith.constant 1.000000e+00 : f32
    %85 = vector.broadcast %cst_35 : f32 to vector<1x64xf32>
    %86 = arith.addf %85, %84 : vector<1x64xf32>
    %87 = arith.divf %85, %86 : vector<1x64xf32>
    %88 = vector.extract_strided_slice %75 {offsets = [0, 128], sizes = [1, 64], strides = [1, 1]} : vector<1x256xf32> to vector<1x64xf32>
    %89 = math.tanh %88 : vector<1x64xf32>
    %90 = vector.extract_strided_slice %75 {offsets = [0, 192], sizes = [1, 64], strides = [1, 1]} : vector<1x256xf32> to vector<1x64xf32>
    %91 = arith.negf %90 : vector<1x64xf32>
    %92 = math.exp %91 : vector<1x64xf32>
    %cst_36 = arith.constant 1.000000e+00 : f32
    %93 = vector.broadcast %cst_36 : f32 to vector<1x64xf32>
    %94 = arith.addf %93, %92 : vector<1x64xf32>
    %95 = arith.divf %93, %94 : vector<1x64xf32>
    %96 = arith.mulf %87, %67 : vector<1x64xf32>
    %97 = arith.mulf %81, %89 : vector<1x64xf32>
    %98 = arith.addf %96, %97 : vector<1x64xf32>
    %99 = math.tanh %98 : vector<1x64xf32>
    %100 = arith.mulf %95, %99 : vector<1x64xf32>
    %c2_37 = arith.constant 2 : index
    %c0_38 = arith.constant 0 : index
    %101 = vector.load %arg10[%c2_37, %c0_38] : memref<8x64xf32, #tpu.memory_space<vmem>>, vector<1x64xf32>
    tpu.vector_store %arg10[%c2_37, %c0_38], %100 {strides = array<i32>} : memref<8x64xf32, #tpu.memory_space<vmem>>, vector<1x64xf32>,
    %102 = arith.truncf %100 : vector<1x64xf32> to vector<1x64xbf16>
    %c0_39 = arith.constant 0 : index
    %c0_40 = arith.constant 0 : index
    %103 = vector.load %arg3[%c0_39, %c0_40] : memref<64x256xbf16, #tpu.memory_space<vmem>>, vector<64x256xbf16>
    %cst_41 = arith.constant dense<0.000000e+00> : vector<1x256xf32>
    %104 = tpu.matmul %102, %103, %cst_41 {dimension_numbers = #tpu.dot_dimension_numbers<[1], [0], [0], [1], [0, 0, 1, 1], [], []>} : vector<1x64xbf16>, vector<64x256xbf16>, vector<1x256xf32> -> vector<1x256xf32>
    %c3 = arith.constant 3 : index
    %c0_42 = arith.constant 0 : index
    %105 = vector.load %arg9[%c3, %c0_42] : memref<8x256xf32, #tpu.memory_space<vmem>>, vector<1x256xf32>
    %106 = arith.addf %104, %105 : vector<1x256xf32>
    %107 = vector.extract_strided_slice %106 {offsets = [0, 0], sizes = [1, 64], strides = [1, 1]} : vector<1x256xf32> to vector<1x64xf32>
    %108 = arith.negf %107 : vector<1x64xf32>
    %109 = math.exp %108 : vector<1x64xf32>
    %cst_43 = arith.constant 1.000000e+00 : f32
    %110 = vector.broadcast %cst_43 : f32 to vector<1x64xf32>
    %111 = arith.addf %110, %109 : vector<1x64xf32>
    %112 = arith.divf %110, %111 : vector<1x64xf32>
    %113 = vector.extract_strided_slice %106 {offsets = [0, 64], sizes = [1, 64], strides = [1, 1]} : vector<1x256xf32> to vector<1x64xf32>
    %114 = arith.negf %113 : vector<1x64xf32>
    %115 = math.exp %114 : vector<1x64xf32>
    %cst_44 = arith.constant 1.000000e+00 : f32
    %116 = vector.broadcast %cst_44 : f32 to vector<1x64xf32>
    %117 = arith.addf %116, %115 : vector<1x64xf32>
    %118 = arith.divf %116, %117 : vector<1x64xf32>
    %119 = vector.extract_strided_slice %106 {offsets = [0, 128], sizes = [1, 64], strides = [1, 1]} : vector<1x256xf32> to vector<1x64xf32>
    %120 = math.tanh %119 : vector<1x64xf32>
    %121 = vector.extract_strided_slice %106 {offsets = [0, 192], sizes = [1, 64], strides = [1, 1]} : vector<1x256xf32> to vector<1x64xf32>
    %122 = arith.negf %121 : vector<1x64xf32>
    %123 = math.exp %122 : vector<1x64xf32>
    %cst_45 = arith.constant 1.000000e+00 : f32
    %124 = vector.broadcast %cst_45 : f32 to vector<1x64xf32>
    %125 = arith.addf %124, %123 : vector<1x64xf32>
    %126 = arith.divf %124, %125 : vector<1x64xf32>
    %127 = arith.mulf %118, %98 : vector<1x64xf32>
    %128 = arith.mulf %112, %120 : vector<1x64xf32>
    %129 = arith.addf %127, %128 : vector<1x64xf32>
    %130 = math.tanh %129 : vector<1x64xf32>
    %131 = arith.mulf %126, %130 : vector<1x64xf32>
    %c3_46 = arith.constant 3 : index
    %c0_47 = arith.constant 0 : index
    %132 = vector.load %arg10[%c3_46, %c0_47] : memref<8x64xf32, #tpu.memory_space<vmem>>, vector<1x64xf32>
    tpu.vector_store %arg10[%c3_46, %c0_47], %131 {strides = array<i32>} : memref<8x64xf32, #tpu.memory_space<vmem>>, vector<1x64xf32>,
    %133 = arith.truncf %131 : vector<1x64xf32> to vector<1x64xbf16>
    %c0_48 = arith.constant 0 : index
    %c0_49 = arith.constant 0 : index
    %134 = vector.load %arg3[%c0_48, %c0_49] : memref<64x256xbf16, #tpu.memory_space<vmem>>, vector<64x256xbf16>
    %cst_50 = arith.constant dense<0.000000e+00> : vector<1x256xf32>
    %135 = tpu.matmul %133, %134, %cst_50 {dimension_numbers = #tpu.dot_dimension_numbers<[1], [0], [0], [1], [0, 0, 1, 1], [], []>} : vector<1x64xbf16>, vector<64x256xbf16>, vector<1x256xf32> -> vector<1x256xf32>
    %c4 = arith.constant 4 : index
    %c0_51 = arith.constant 0 : index
    %136 = vector.load %arg9[%c4, %c0_51] : memref<8x256xf32, #tpu.memory_space<vmem>>, vector<1x256xf32>
    %137 = arith.addf %135, %136 : vector<1x256xf32>
    %138 = vector.extract_strided_slice %137 {offsets = [0, 0], sizes = [1, 64], strides = [1, 1]} : vector<1x256xf32> to vector<1x64xf32>
    %139 = arith.negf %138 : vector<1x64xf32>
    %140 = math.exp %139 : vector<1x64xf32>
    %cst_52 = arith.constant 1.000000e+00 : f32
    %141 = vector.broadcast %cst_52 : f32 to vector<1x64xf32>
    %142 = arith.addf %141, %140 : vector<1x64xf32>
    %143 = arith.divf %141, %142 : vector<1x64xf32>
    %144 = vector.extract_strided_slice %137 {offsets = [0, 64], sizes = [1, 64], strides = [1, 1]} : vector<1x256xf32> to vector<1x64xf32>
    %145 = arith.negf %144 : vector<1x64xf32>
    %146 = math.exp %145 : vector<1x64xf32>
    %cst_53 = arith.constant 1.000000e+00 : f32
    %147 = vector.broadcast %cst_53 : f32 to vector<1x64xf32>
    %148 = arith.addf %147, %146 : vector<1x64xf32>
    %149 = arith.divf %147, %148 : vector<1x64xf32>
    %150 = vector.extract_strided_slice %137 {offsets = [0, 128], sizes = [1, 64], strides = [1, 1]} : vector<1x256xf32> to vector<1x64xf32>
    %151 = math.tanh %150 : vector<1x64xf32>
    %152 = vector.extract_strided_slice %137 {offsets = [0, 192], sizes = [1, 64], strides = [1, 1]} : vector<1x256xf32> to vector<1x64xf32>
    %153 = arith.negf %152 : vector<1x64xf32>
    %154 = math.exp %153 : vector<1x64xf32>
    %cst_54 = arith.constant 1.000000e+00 : f32
    %155 = vector.broadcast %cst_54 : f32 to vector<1x64xf32>
    %156 = arith.addf %155, %154 : vector<1x64xf32>
    %157 = arith.divf %155, %156 : vector<1x64xf32>
    %158 = arith.mulf %149, %129 : vector<1x64xf32>
    %159 = arith.mulf %143, %151 : vector<1x64xf32>
    %160 = arith.addf %158, %159 : vector<1x64xf32>
    %161 = math.tanh %160 : vector<1x64xf32>
    %162 = arith.mulf %157, %161 : vector<1x64xf32>
    %c4_55 = arith.constant 4 : index
    %c0_56 = arith.constant 0 : index
    %163 = vector.load %arg10[%c4_55, %c0_56] : memref<8x64xf32, #tpu.memory_space<vmem>>, vector<1x64xf32>
    tpu.vector_store %arg10[%c4_55, %c0_56], %162 {strides = array<i32>} : memref<8x64xf32, #tpu.memory_space<vmem>>, vector<1x64xf32>,
    %164 = arith.truncf %162 : vector<1x64xf32> to vector<1x64xbf16>
    %c0_57 = arith.constant 0 : index
    %c0_58 = arith.constant 0 : index
    %165 = vector.load %arg3[%c0_57, %c0_58] : memref<64x256xbf16, #tpu.memory_space<vmem>>, vector<64x256xbf16>
    %cst_59 = arith.constant dense<0.000000e+00> : vector<1x256xf32>
    %166 = tpu.matmul %164, %165, %cst_59 {dimension_numbers = #tpu.dot_dimension_numbers<[1], [0], [0], [1], [0, 0, 1, 1], [], []>} : vector<1x64xbf16>, vector<64x256xbf16>, vector<1x256xf32> -> vector<1x256xf32>
    %c5 = arith.constant 5 : index
    %c0_60 = arith.constant 0 : index
    %167 = vector.load %arg9[%c5, %c0_60] : memref<8x256xf32, #tpu.memory_space<vmem>>, vector<1x256xf32>
    %168 = arith.addf %166, %167 : vector<1x256xf32>
    %169 = vector.extract_strided_slice %168 {offsets = [0, 0], sizes = [1, 64], strides = [1, 1]} : vector<1x256xf32> to vector<1x64xf32>
    %170 = arith.negf %169 : vector<1x64xf32>
    %171 = math.exp %170 : vector<1x64xf32>
    %cst_61 = arith.constant 1.000000e+00 : f32
    %172 = vector.broadcast %cst_61 : f32 to vector<1x64xf32>
    %173 = arith.addf %172, %171 : vector<1x64xf32>
    %174 = arith.divf %172, %173 : vector<1x64xf32>
    %175 = vector.extract_strided_slice %168 {offsets = [0, 64], sizes = [1, 64], strides = [1, 1]} : vector<1x256xf32> to vector<1x64xf32>
    %176 = arith.negf %175 : vector<1x64xf32>
    %177 = math.exp %176 : vector<1x64xf32>
    %cst_62 = arith.constant 1.000000e+00 : f32
    %178 = vector.broadcast %cst_62 : f32 to vector<1x64xf32>
    %179 = arith.addf %178, %177 : vector<1x64xf32>
    %180 = arith.divf %178, %179 : vector<1x64xf32>
    %181 = vector.extract_strided_slice %168 {offsets = [0, 128], sizes = [1, 64], strides = [1, 1]} : vector<1x256xf32> to vector<1x64xf32>
    %182 = math.tanh %181 : vector<1x64xf32>
    %183 = vector.extract_strided_slice %168 {offsets = [0, 192], sizes = [1, 64], strides = [1, 1]} : vector<1x256xf32> to vector<1x64xf32>
    %184 = arith.negf %183 : vector<1x64xf32>
    %185 = math.exp %184 : vector<1x64xf32>
    %cst_63 = arith.constant 1.000000e+00 : f32
    %186 = vector.broadcast %cst_63 : f32 to vector<1x64xf32>
    %187 = arith.addf %186, %185 : vector<1x64xf32>
    %188 = arith.divf %186, %187 : vector<1x64xf32>
    %189 = arith.mulf %180, %160 : vector<1x64xf32>
    %190 = arith.mulf %174, %182 : vector<1x64xf32>
    %191 = arith.addf %189, %190 : vector<1x64xf32>
    %192 = math.tanh %191 : vector<1x64xf32>
    %193 = arith.mulf %188, %192 : vector<1x64xf32>
    %c5_64 = arith.constant 5 : index
    %c0_65 = arith.constant 0 : index
    %194 = vector.load %arg10[%c5_64, %c0_65] : memref<8x64xf32, #tpu.memory_space<vmem>>, vector<1x64xf32>
    tpu.vector_store %arg10[%c5_64, %c0_65], %193 {strides = array<i32>} : memref<8x64xf32, #tpu.memory_space<vmem>>, vector<1x64xf32>,
    %195 = arith.truncf %193 : vector<1x64xf32> to vector<1x64xbf16>
    %c0_66 = arith.constant 0 : index
    %c0_67 = arith.constant 0 : index
    %196 = vector.load %arg3[%c0_66, %c0_67] : memref<64x256xbf16, #tpu.memory_space<vmem>>, vector<64x256xbf16>
    %cst_68 = arith.constant dense<0.000000e+00> : vector<1x256xf32>
    %197 = tpu.matmul %195, %196, %cst_68 {dimension_numbers = #tpu.dot_dimension_numbers<[1], [0], [0], [1], [0, 0, 1, 1], [], []>} : vector<1x64xbf16>, vector<64x256xbf16>, vector<1x256xf32> -> vector<1x256xf32>
    %c6 = arith.constant 6 : index
    %c0_69 = arith.constant 0 : index
    %198 = vector.load %arg9[%c6, %c0_69] : memref<8x256xf32, #tpu.memory_space<vmem>>, vector<1x256xf32>
    %199 = arith.addf %197, %198 : vector<1x256xf32>
    %200 = vector.extract_strided_slice %199 {offsets = [0, 0], sizes = [1, 64], strides = [1, 1]} : vector<1x256xf32> to vector<1x64xf32>
    %201 = arith.negf %200 : vector<1x64xf32>
    %202 = math.exp %201 : vector<1x64xf32>
    %cst_70 = arith.constant 1.000000e+00 : f32
    %203 = vector.broadcast %cst_70 : f32 to vector<1x64xf32>
    %204 = arith.addf %203, %202 : vector<1x64xf32>
    %205 = arith.divf %203, %204 : vector<1x64xf32>
    %206 = vector.extract_strided_slice %199 {offsets = [0, 64], sizes = [1, 64], strides = [1, 1]} : vector<1x256xf32> to vector<1x64xf32>
    %207 = arith.negf %206 : vector<1x64xf32>
    %208 = math.exp %207 : vector<1x64xf32>
    %cst_71 = arith.constant 1.000000e+00 : f32
    %209 = vector.broadcast %cst_71 : f32 to vector<1x64xf32>
    %210 = arith.addf %209, %208 : vector<1x64xf32>
    %211 = arith.divf %209, %210 : vector<1x64xf32>
    %212 = vector.extract_strided_slice %199 {offsets = [0, 128], sizes = [1, 64], strides = [1, 1]} : vector<1x256xf32> to vector<1x64xf32>
    %213 = math.tanh %212 : vector<1x64xf32>
    %214 = vector.extract_strided_slice %199 {offsets = [0, 192], sizes = [1, 64], strides = [1, 1]} : vector<1x256xf32> to vector<1x64xf32>
    %215 = arith.negf %214 : vector<1x64xf32>
    %216 = math.exp %215 : vector<1x64xf32>
    %cst_72 = arith.constant 1.000000e+00 : f32
    %217 = vector.broadcast %cst_72 : f32 to vector<1x64xf32>
    %218 = arith.addf %217, %216 : vector<1x64xf32>
    %219 = arith.divf %217, %218 : vector<1x64xf32>
    %220 = arith.mulf %211, %191 : vector<1x64xf32>
    %221 = arith.mulf %205, %213 : vector<1x64xf32>
    %222 = arith.addf %220, %221 : vector<1x64xf32>
    %223 = math.tanh %222 : vector<1x64xf32>
    %224 = arith.mulf %219, %223 : vector<1x64xf32>
    %c6_73 = arith.constant 6 : index
    %c0_74 = arith.constant 0 : index
    %225 = vector.load %arg10[%c6_73, %c0_74] : memref<8x64xf32, #tpu.memory_space<vmem>>, vector<1x64xf32>
    tpu.vector_store %arg10[%c6_73, %c0_74], %224 {strides = array<i32>} : memref<8x64xf32, #tpu.memory_space<vmem>>, vector<1x64xf32>,
    %226 = arith.truncf %224 : vector<1x64xf32> to vector<1x64xbf16>
    %c0_75 = arith.constant 0 : index
    %c0_76 = arith.constant 0 : index
    %227 = vector.load %arg3[%c0_75, %c0_76] : memref<64x256xbf16, #tpu.memory_space<vmem>>, vector<64x256xbf16>
    %cst_77 = arith.constant dense<0.000000e+00> : vector<1x256xf32>
    %228 = tpu.matmul %226, %227, %cst_77 {dimension_numbers = #tpu.dot_dimension_numbers<[1], [0], [0], [1], [0, 0, 1, 1], [], []>} : vector<1x64xbf16>, vector<64x256xbf16>, vector<1x256xf32> -> vector<1x256xf32>
    %c7 = arith.constant 7 : index
    %c0_78 = arith.constant 0 : index
    %229 = vector.load %arg9[%c7, %c0_78] : memref<8x256xf32, #tpu.memory_space<vmem>>, vector<1x256xf32>
    %230 = arith.addf %228, %229 : vector<1x256xf32>
    %231 = vector.extract_strided_slice %230 {offsets = [0, 0], sizes = [1, 64], strides = [1, 1]} : vector<1x256xf32> to vector<1x64xf32>
    %232 = arith.negf %231 : vector<1x64xf32>
    %233 = math.exp %232 : vector<1x64xf32>
    %cst_79 = arith.constant 1.000000e+00 : f32
    %234 = vector.broadcast %cst_79 : f32 to vector<1x64xf32>
    %235 = arith.addf %234, %233 : vector<1x64xf32>
    %236 = arith.divf %234, %235 : vector<1x64xf32>
    %237 = vector.extract_strided_slice %230 {offsets = [0, 64], sizes = [1, 64], strides = [1, 1]} : vector<1x256xf32> to vector<1x64xf32>
    %238 = arith.negf %237 : vector<1x64xf32>
    %239 = math.exp %238 : vector<1x64xf32>
    %cst_80 = arith.constant 1.000000e+00 : f32
    %240 = vector.broadcast %cst_80 : f32 to vector<1x64xf32>
    %241 = arith.addf %240, %239 : vector<1x64xf32>
    %242 = arith.divf %240, %241 : vector<1x64xf32>
    %243 = vector.extract_strided_slice %230 {offsets = [0, 128], sizes = [1, 64], strides = [1, 1]} : vector<1x256xf32> to vector<1x64xf32>
    %244 = math.tanh %243 : vector<1x64xf32>
    %245 = vector.extract_strided_slice %230 {offsets = [0, 192], sizes = [1, 64], strides = [1, 1]} : vector<1x256xf32> to vector<1x64xf32>
    %246 = arith.negf %245 : vector<1x64xf32>
    %247 = math.exp %246 : vector<1x64xf32>
    %cst_81 = arith.constant 1.000000e+00 : f32
    %248 = vector.broadcast %cst_81 : f32 to vector<1x64xf32>
    %249 = arith.addf %248, %247 : vector<1x64xf32>
    %250 = arith.divf %248, %249 : vector<1x64xf32>
    %251 = arith.mulf %242, %222 : vector<1x64xf32>
    %252 = arith.mulf %236, %244 : vector<1x64xf32>
    %253 = arith.addf %251, %252 : vector<1x64xf32>
    %254 = math.tanh %253 : vector<1x64xf32>
    %255 = arith.mulf %250, %254 : vector<1x64xf32>
    %c7_82 = arith.constant 7 : index
    %c0_83 = arith.constant 0 : index
    %256 = vector.load %arg10[%c7_82, %c0_83] : memref<8x64xf32, #tpu.memory_space<vmem>>, vector<1x64xf32>
    tpu.vector_store %arg10[%c7_82, %c0_83], %255 {strides = array<i32>} : memref<8x64xf32, #tpu.memory_space<vmem>>, vector<1x64xf32>,
    %257 = tpu.iota {dimensions = array<i32: 0>} : vector<8x8xi32>
    %258 = tpu.iota {dimensions = array<i32: 1>} : vector<8x8xi32>
    %259 = arith.addi %257, %258 : vector<8x8xi32>
    %c7_i32 = arith.constant 7 : i32
    %260 = vector.broadcast %c7_i32 : i32 to vector<8x8xi32>
    %261 = arith.cmpi eq, %259, %260 : vector<8x8xi32>
    %262 = arith.extui %261 : vector<8x8xi1> to vector<8x8xi32>
    %263 = arith.sitofp %262 : vector<8x8xi32> to vector<8x8xf32>
    %c0_84 = arith.constant 0 : index
    %c0_85 = arith.constant 0 : index
    %264 = vector.load %arg10[%c0_84, %c0_85] : memref<8x64xf32, #tpu.memory_space<vmem>>, vector<8x64xf32>
    %265 = vector.extract_strided_slice %264 {offsets = [0, 0], sizes = [8, 32], strides = [1, 1]} : vector<8x64xf32> to vector<8x32xf32>
    %c0_86 = arith.constant 0 : index
    %c0_87 = arith.constant 0 : index
    %266 = vector.load %arg6[%c0_86, %c0_87] : memref<64x8xf32, #tpu.memory_space<vmem>>, vector<32x8xf32>
    %cst_88 = arith.constant dense<0.000000e+00> : vector<8x8xf32>
    %267 = tpu.matmul %265, %266, %cst_88 {dimension_numbers = #tpu.dot_dimension_numbers<[1], [0], [0], [1], [0, 0, 1, 1], [], []>} : vector<8x32xf32>, vector<32x8xf32>, vector<8x8xf32> -> vector<8x8xf32>
    %268 = vector.extract_strided_slice %264 {offsets = [0, 32], sizes = [8, 32], strides = [1, 1]} : vector<8x64xf32> to vector<8x32xf32>
    %c32 = arith.constant 32 : index
    %c0_89 = arith.constant 0 : index
    %269 = vector.load %arg6[%c32, %c0_89] : memref<64x8xf32, #tpu.memory_space<vmem>>, vector<32x8xf32>
    %cst_90 = arith.constant dense<0.000000e+00> : vector<8x8xf32>
    %270 = tpu.matmul %268, %269, %cst_90 {dimension_numbers = #tpu.dot_dimension_numbers<[1], [0], [0], [1], [0, 0, 1, 1], [], []>} : vector<8x32xf32>, vector<32x8xf32>, vector<8x8xf32> -> vector<8x8xf32>
    %cst_91 = arith.constant dense<0.000000e+00> : vector<8x8xf32>
    %271 = tpu.matmul %263, %270, %cst_91 {dimension_numbers = #tpu.dot_dimension_numbers<[1], [0], [0], [1], [0, 0, 1, 1], [], []>} : vector<8x8xf32>, vector<8x8xf32>, vector<8x8xf32> -> vector<8x8xf32>
    %272 = arith.addf %267, %271 : vector<8x8xf32>
    %c0_92 = arith.constant 0 : index
    %c0_93 = arith.constant 0 : index
    %273 = vector.load %arg7[%c0_92, %c0_93] : memref<1x8xf32, #tpu.memory_space<vmem>>, vector<1x8xf32>
    %274 = vector.broadcast %273 : vector<1x8xf32> to vector<8x8xf32>
    %275 = arith.addf %272, %274 : vector<8x8xf32>
    %c0_94 = arith.constant 0 : index
    %c0_95 = arith.constant 0 : index
    %276 = vector.load %arg8[%c0_94, %c0_95] : memref<8x8xf32, #tpu.memory_space<vmem>>, vector<8x8xf32>
    tpu.vector_store %arg8[%c0_94, %c0_95], %275 {strides = array<i32>} : memref<8x8xf32, #tpu.memory_space<vmem>>, vector<8x8xf32>,
    return
  }
}

</mosaic_0001>

<llo_original>
// kernel: bilstm_forward.1
$region0: #{bilstm_forward.1}
  #allocation0 [shape = 'u32[]', space=smem, size = 0x4, offset = 0x4, fixed_abs, tag = 'smem constant byte address 0x4 - core index']
  #allocation1 [shape = 'u32[72,128]{1,0:T(1,128)}', space=vmem, size = 0x9000, scoped, tag = 'internal scratch']
  #allocation2 [shape = 'f32[8,256]{1,0:T(8,128)}', space=vmem, size = 0x2000, scoped, tag = 'scratch operand']
  #allocation3 [shape = 'f32[8,64]{1,0:T(8,128)}', space=vmem, size = 0x1000, scoped, tag = 'scratch operand']
  %s0 = inlined_call_operand.vmem [shape: bf16[8,32], index: 0, kind: input, shape index: {}]
  %s1 = inlined_call_operand.hbm [shape: bf16[32,256], index: 1, kind: input, shape index: {}]
  %s2 = inlined_call_operand.vmem [shape: f32[1,256], index: 2, kind: input, shape index: {}]
  %s3 = inlined_call_operand.vmem [shape: bf16[64,256], index: 3, kind: input, shape index: {}]
  %s4 = inlined_call_operand.vmem [shape: f32[1,64], index: 4, kind: input, shape index: {}]
  %s5 = inlined_call_operand.vmem [shape: f32[1,64], index: 5, kind: input, shape index: {}]
  %s6 = inlined_call_operand.vmem [shape: f32[64,8], index: 6, kind: input, shape index: {}]
  %s7 = inlined_call_operand.vmem [shape: f32[1,8], index: 7, kind: input, shape index: {}]
  %s8 = inlined_call_operand.hbm [shape: f32[8,8], index: 8, kind: output, shape index: {}]
  %s9 = sld [smem:[#allocation0]]
  $region46: #{bilstm_forward.1} parent=0
    _
  %s11 = ssub.s32 1, %s9
  %s12 = scalar_select 0, %s11, %s9
  $region1: #{bilstm_forward.1} parent=0
    #allocation4 [shape = 'u8[16384]{0}', space=vmem, size = 0x4000, scoped, tag = 'input window, operand 1, single buffered']
    #allocation5 [shape = 's32[1]{0}', space=sflag, size = 0x4, scoped, tag = 'scoped memory for bilstm_forward.1']
    #allocation6 [shape = 's32[1]{0}', space=sflag, size = 0x4, scoped, tag = 'scoped memory for bilstm_forward.1']
    #allocation7 [shape = 'u8[4096]{0}', space=vmem, size = 0x1000, scoped, tag = 'output window, operand 0, single buffered']
    %13 = vsyncpa [#allocation5], 0
    %14 = vsyncpa [#allocation6], 0
    // Predicated region
    $region2: #{bilstm_forward.1} parent=1 // pred_check
      _
    $region3: #{bilstm_forward.1} parent=1 // pred_check_branch
      %16 = sbr.rel (0) target = $region5
    $region4: #{bilstm_forward.1} parent=1 // pred_region
      _
    $region5: #{bilstm_forward.1} parent=1 // pred_fallthru
      _
    // Predicated region
    $region6: #{bilstm_forward.1} parent=1 // pred_check
      _
    $region7: #{bilstm_forward.1} parent=1 // pred_check_branch
      %18 = sbr.rel (0) target = $region9
    $region8: #{bilstm_forward.1} parent=1 // pred_region
      %20 = vsyncadd [#allocation5], 0
      %s21 = sshll.u32 %s1, 4
      %s22 = int_to_ptr.hbm [resolvable:$true] %s21
      %s23 = sshll.u32 [#allocation4], 4
      %s24 = int_to_ptr.vmem [resolvable:$true] %s23
      %29 = dma.hbm_to_vmem [thread:$0]  %s22, 512, %s24, [#allocation5], 128, 128, 8
    $region9: #{bilstm_forward.1} parent=1 // pred_fallthru
      _
    // Predicated region
    $region10: #{bilstm_forward.1} parent=1 // pred_check
      _
    $region11: #{bilstm_forward.1} parent=1 // pred_check_branch
      %31 = sbr.rel (0) target = $region13
    $region12: #{bilstm_forward.1} parent=1 // pred_region
      _
    $region13: #{bilstm_forward.1} parent=1 // pred_fallthru
      _
    // Predicated region
    $region14: #{bilstm_forward.1} parent=1 // pred_check
      _
    $region15: #{bilstm_forward.1} parent=1 // pred_check_branch
      %33 = sbr.rel (0) target = $region17
    $region16: #{bilstm_forward.1} parent=1 // pred_region
      _
    $region17: #{bilstm_forward.1} parent=1 // pred_fallthru
      _
    // Predicated region
    $region18: #{bilstm_forward.1} parent=1 // pred_check
      _
    $region19: #{bilstm_forward.1} parent=1 // pred_check_branch
      %35 = sbr.rel (0) target = $region21
    $region20: #{bilstm_forward.1} parent=1 // pred_region
      _
    $region21: #{bilstm_forward.1} parent=1 // pred_fallthru
      _
    // Predicated region
    $region22: #{bilstm_forward.1} parent=1 // pred_check
      _
    $region23: #{bilstm_forward.1} parent=1 // pred_check_branch
      %37 = sbr.rel (0) target = $region25
    $region24: #{bilstm_forward.1} parent=1 // pred_region
      _
    $region25: #{bilstm_forward.1} parent=1 // pred_fallthru
      _
    // Predicated region
    $region26: #{bilstm_forward.1} parent=1 // pred_check
      _
    $region27: #{bilstm_forward.1} parent=1 // pred_check_branch
      %39 = sbr.rel (0) target = $region29
    $region28: #{bilstm_forward.1} parent=1 // pred_region
      _
    $region29: #{bilstm_forward.1} parent=1 // pred_fallthru
      _
    // Predicated region
    $region30: #{bilstm_forward.1} parent=1 // pred_check
      _
    $region31: #{bilstm_forward.1} parent=1 // pred_check_branch
      %41 = sbr.rel (0) target = $region33
    $region32: #{bilstm_forward.1} parent=1 // pred_region
      _
    $region33: #{bilstm_forward.1} parent=1 // pred_fallthru
      _
    // Predicated region
    $region34: #{bilstm_forward.1} parent=1 // pred_check
      _
    $region35: #{bilstm_forward.1} parent=1 // pred_check_branch
      %43 = sbr.rel (0) target = $region37
    $region36: #{bilstm_forward.1} parent=1 // pred_region
      %45 = dma.done [#allocation5], 512
    $region37: #{bilstm_forward.1} parent=1 // pred_fallthru
      _
    %v47 = vld [vmem:[%s0] sm:$0xf]
    %v48 = vld [vmem:[#allocation4] sm:$0xff]
    %v49 = vld [vmem:[#allocation4 + $0x8] sm:$0xff]
    %v50 = vld [vmem:[#allocation4 + $0x10] sm:$0xff]
    %v51 = vld [vmem:[#allocation4 + $0x18] sm:$0xff]
    %v52 = vld [vmem:[%s2] sm:$0x3]
    %v54 = vperm.slane %v52, 0
    %v55 = vperm.slane %v52, 1
    %v62 = vunpack.c.l.b16 %v48
    %v63 = vunpack.c.h.b16 %v48
    %v64 = vunpack.c.l.b16 %v49
    %v65 = vunpack.c.h.b16 %v49
    %v66 = vunpack.c.l.b16 %v50
    %v67 = vunpack.c.h.b16 %v50
    %v68 = vunpack.c.l.b16 %v51
    %v69 = vunpack.c.h.b16 %v51
    %v70 = vpack.c.b16 %v64, %v62
    %v71 = vpack.c.b16 %v65, %v63
    %v72 = vpack.c.b16 %v68, %v66
    %v73 = vpack.c.b16 %v69, %v67
    %vm78 = vcmask 261120
    %v80 = vsel %vm78, %v47, 0
    %82 = vmatpush.bf16.msra.mxu0 0
    %83 = vmatpush.bf16.msra.mxu0 0
    %84 = vmatpush.bf16.msra.mxu0 0
    %85 = vmatpush.bf16.msra.mxu0 0
    %86 = vmatpush.bf16.msra.mxu0 0
    %87 = vmatpush.bf16.msra.mxu0 0
    %88 = vmatpush.bf16.msra.mxu0 %v72
    %89 = vmatpush.bf16.msra.mxu0 %v70
    %90 = vmatmul.bf16.gmra.mxu0 %v80
    %v91 = vpop.f32.mrf.mxu0
    %v92 = vadd.f32 %v54, %v91
    %v93 = vpop.f32.mrf.mxu0
    %94 = vdwg.mxu0
    %95 = vmatpush.bf16.msra.mxu0 0
    %96 = vmatpush.bf16.msra.mxu0 0
    %97 = vmatpush.bf16.msra.mxu0 0
    %98 = vmatpush.bf16.msra.mxu0 0
    %99 = vmatpush.bf16.msra.mxu0 0
    %100 = vmatpush.bf16.msra.mxu0 0
    %101 = vmatpush.bf16.msra.mxu0 %v73
    %102 = vmatpush.bf16.msra.mxu0 %v71
    %103 = vmatmul.bf16.gmra.mxu0 %v80
    %v104 = vpop.f32.mrf.mxu0
    %v105 = vadd.f32 %v55, %v104
    %v106 = vpop.f32.mrf.mxu0
    %107 = vdwg.mxu0
    %108 = vst [vmem:[#allocation2] sm:$0xff] %v92
    %109 = vst [vmem:[#allocation2 + $0x8] sm:$0xff] %v105
    %v110 = vld [vmem:[%s4] sm:$0x1]
    %v111 = vld [vmem:[%s5] sm:$0x1]
    %v112 = vpack.c.bf16 %v110, %v110
    %v113 = vld [vmem:[%s3] sm:$0xff]
    %v114 = vld [vmem:[%s3 + $0x8] sm:$0xff]
    %v115 = vld [vmem:[%s3 + $0x10] sm:$0xff]
    %v116 = vld [vmem:[%s3 + $0x18] sm:$0xff]
    %v117 = vld [vmem:[%s3 + $0x20] sm:$0xff]
    %v118 = vld [vmem:[%s3 + $0x28] sm:$0xff]
    %v119 = vld [vmem:[%s3 + $0x30] sm:$0xff]
    %v120 = vld [vmem:[%s3 + $0x38] sm:$0xff]
    %v121 = vld [vmem:[#allocation2] ss:$8 sm:$0x3]
    %v130 = vunpack.c.l.b16 %v113
    %v131 = vunpack.c.h.b16 %v113
    %v132 = vunpack.c.l.b16 %v114
    %v133 = vunpack.c.h.b16 %v114
    %v134 = vunpack.c.l.b16 %v115
    %v135 = vunpack.c.h.b16 %v115
    %v136 = vunpack.c.l.b16 %v116
    %v137 = vunpack.c.h.b16 %v116
    %v138 = vunpack.c.l.b16 %v117
    %v139 = vunpack.c.h.b16 %v117
    %v140 = vunpack.c.l.b16 %v118
    %v141 = vunpack.c.h.b16 %v118
    %v142 = vunpack.c.l.b16 %v119
    %v143 = vunpack.c.h.b16 %v119
    %v144 = vunpack.c.l.b16 %v120
    %v145 = vunpack.c.h.b16 %v120
    %v146 = vpack.c.b16 %v132, %v130
    %v147 = vpack.c.b16 %v133, %v131
    %v148 = vpack.c.b16 %v136, %v134
    %v149 = vpack.c.b16 %v137, %v135
    %v150 = vpack.c.b16 %v140, %v138
    %v151 = vpack.c.b16 %v141, %v139
    %v152 = vpack.c.b16 %v144, %v142
    %v153 = vpack.c.b16 %v145, %v143
    %v163 = vperm.slane %v121, 0
    %v164 = vperm.slane %v121, 1
    %vm167 = vcmask 523264
    %v169 = vsel %vm167, %v112, 0
    %171 = vmatpush.bf16.msra.mxu0 0
    %172 = vmatpush.bf16.msra.mxu0 0
    %173 = vmatpush.bf16.msra.mxu0 0
    %174 = vmatpush.bf16.msra.mxu0 0
    %175 = vmatpush.bf16.msra.mxu0 %v152
    %176 = vmatpush.bf16.msra.mxu0 %v150
    %177 = vmatpush.bf16.msra.mxu0 %v148
    %178 = vmatpush.bf16.msra.mxu0 %v146
    %179 = vmatmul.bf16.gmra.mxu0 %v169
    %v180 = vpop.f32.mrf.mxu0
    %v181 = vadd.f32 %v163, %v180
    %v182 = vpop.f32.mrf.mxu0
    %183 = vdwg.mxu0
    %184 = vmatpush.bf16.msra.mxu0 0
    %185 = vmatpush.bf16.msra.mxu0 0
    %186 = vmatpush.bf16.msra.mxu0 0
    %187 = vmatpush.bf16.msra.mxu0 0
    %188 = vmatpush.bf16.msra.mxu0 %v153
    %189 = vmatpush.bf16.msra.mxu0 %v151
    %190 = vmatpush.bf16.msra.mxu0 %v149
    %191 = vmatpush.bf16.msra.mxu0 %v147
    %192 = vmatmul.bf16.gmra.mxu0 %v169
    %v193 = vpop.f32.mrf.mxu0
    %v194 = vadd.f32 %v164, %v193
    %v195 = vpop.f32.mrf.mxu0
    %196 = vdwg.mxu0
    %v197 = vxor.u32 %v181, 2147483648
    %v198 = vmul.f32 %v197, 1.442695
    %v199 = vpow.pop %v198
    %v200 = vadd.f32 %v199, 1.0
    %v201 = vrcp.pop %v200
    %v202 = vmul.f32 %v200, %v201
    %v203 = vsub.f32 1.0, %v202
    %v204 = vmul.f32 %v201, %v203
    %v205 = vadd.f32 %v201, %v204
    %vm206 = vweird.f32 %v200
    %vm207 = vweird.f32 %v201
    %vm208 = vmor %vm206, %vm207
    %v209 = vsel %vm208, %v201, %v205
    %v210 = vand.u32 2147483647, %v200
    %vm211 = vcmp.eq.f32.partialorder %v210, 8.507059e+37
    %v212 = vand.u32 %v200, 2147483648
    %v213 = vor.u32 1.1754944e-38, %v212
    %v214 = vsel %vm211, %v213, %v209
    %v215 = vmul.f32 1.0, %v214
    %v216 = vtanh.pop %v194
    %v217 = vxor.u32 %v194, 2147483648
    %v218 = vmul.f32 %v217, 1.442695
    %v219 = vpow.pop %v218
    %v220 = vadd.f32 %v219, 1.0
    %v221 = vrcp.pop %v220
    %v222 = vmul.f32 %v220, %v221
    %v223 = vsub.f32 1.0, %v222
    %v224 = vmul.f32 %v221, %v223
    %v225 = vadd.f32 %v221, %v224
    %vm226 = vweird.f32 %v220
    %vm227 = vweird.f32 %v221
    %vm228 = vmor %vm226, %vm227
    %v229 = vsel %vm228, %v221, %v225
    %v230 = vand.u32 2147483647, %v220
    %vm231 = vcmp.eq.f32.partialorder %v230, 8.507059e+37
    %v232 = vand.u32 %v220, 2147483648
    %v233 = vor.u32 1.1754944e-38, %v232
    %v234 = vsel %vm231, %v233, %v229
    %v235 = vmul.f32 1.0, %v234
    %v237 = vperm.slane %v111, 0
    %238 = vrot.lane.b32.xlu0 %v237, 64
    %v239 = vpop.permute.xlu0 %238
    %v241 = vmul.f32 %v215, %v239
    %v242 = vmul.f32 %v215, %v216
    %244 = vrot.lane.b32.xlu0 %v242, 64
    %v245 = vpop.permute.xlu0 %244
    %v247 = vadd.f32 %v241, %v245
    %v248 = vtanh.pop %v247
    %v249 = vmul.f32 %v235, %v248
    %251 = vrot.lane.b32.xlu0 %v249, 64
    %v252 = vpop.permute.xlu0 %251
    %vm254 = vcmask 516096
    %255 = vst.msk [vmem:[#allocation3] sm:$0x1] %vm254, %v252
    %v256 = vpack.c.bf16 %v249, %v249
    %v257 = vld [vmem:[%s3] sm:$0xff]
    %v258 = vld [vmem:[%s3 + $0x8] sm:$0xff]
    %v259 = vld [vmem:[%s3 + $0x10] sm:$0xff]
    %v260 = vld [vmem:[%s3 + $0x18] sm:$0xff]
    %v261 = vld [vmem:[%s3 + $0x20] sm:$0xff]
    %v262 = vld [vmem:[%s3 + $0x28] sm:$0xff]
    %v263 = vld [vmem:[%s3 + $0x30] sm:$0xff]
    %v264 = vld [vmem:[%s3 + $0x38] sm:$0xff]
    %s265 = scalar_lea.vmem [#allocation2], 1
    %v266 = vld [vmem:[%s265] ss:$8 sm:$0x3]
    %268 = vrot.lane.b32.xlu0 %v256, 64
    %v269 = vpop.permute.xlu0 %268
    %v278 = vunpack.c.l.b16 %v257
    %v279 = vunpack.c.h.b16 %v257
    %v280 = vunpack.c.l.b16 %v258
    %v281 = vunpack.c.h.b16 %v258
    %v282 = vunpack.c.l.b16 %v259
    %v283 = vunpack.c.h.b16 %v259
    %v284 = vunpack.c.l.b16 %v260
    %v285 = vunpack.c.h.b16 %v260
    %v286 = vunpack.c.l.b16 %v261
    %v287 = vunpack.c.h.b16 %v261
    %v288 = vunpack.c.l.b16 %v262
    %v289 = vunpack.c.h.b16 %v262
    %v290 = vunpack.c.l.b16 %v263
    %v291 = vunpack.c.h.b16 %v263
    %v292 = vunpack.c.l.b16 %v264
    %v293 = vunpack.c.h.b16 %v264
    %v294 = vpack.c.b16 %v280, %v278
    %v295 = vpack.c.b16 %v281, %v279
    %v296 = vpack.c.b16 %v284, %v282
    %v297 = vpack.c.b16 %v285, %v283
    %v298 = vpack.c.b16 %v288, %v286
    %v299 = vpack.c.b16 %v289, %v287
    %v300 = vpack.c.b16 %v292, %v290
    %v301 = vpack.c.b16 %v293, %v291
    %v311 = vperm.slane %v266, 0
    %v312 = vperm.slane %v266, 1
    %v316 = vsel %vm167, %v269, 0
    %318 = vmatpush.bf16.msra.mxu0 0
    %319 = vmatpush.bf16.msra.mxu0 0
    %320 = vmatpush.bf16.msra.mxu0 0
    %321 = vmatpush.bf16.msra.mxu0 0
    %322 = vmatpush.bf16.msra.mxu0 %v300
    %323 = vmatpush.bf16.msra.mxu0 %v298
    %324 = vmatpush.bf16.msra.mxu0 %v296
    %325 = vmatpush.bf16.msra.mxu0 %v294
    %326 = vmatmul.bf16.gmra.mxu0 %v316
    %v327 = vpop.f32.mrf.mxu0
    %v328 = vadd.f32 %v311, %v327
    %v329 = vpop.f32.mrf.mxu0
    %330 = vdwg.mxu0
    %331 = vmatpush.bf16.msra.mxu0 0
    %332 = vmatpush.bf16.msra.mxu0 0
    %333 = vmatpush.bf16.msra.mxu0 0
    %334 = vmatpush.bf16.msra.mxu0 0
    %335 = vmatpush.bf16.msra.mxu0 %v301
    %336 = vmatpush.bf16.msra.mxu0 %v299
    %337 = vmatpush.bf16.msra.mxu0 %v297
    %338 = vmatpush.bf16.msra.mxu0 %v295
    %339 = vmatmul.bf16.gmra.mxu0 %v316
    %v340 = vpop.f32.mrf.mxu0
    %v341 = vadd.f32 %v312, %v340
    %v342 = vpop.f32.mrf.mxu0
    %343 = vdwg.mxu0
    %v344 = vxor.u32 %v328, 2147483648
    %v345 = vmul.f32 %v344, 1.442695
    %v346 = vpow.pop %v345
    %v347 = vadd.f32 %v346, 1.0
    %v348 = vrcp.pop %v347
    %v349 = vmul.f32 %v347, %v348
    %v350 = vsub.f32 1.0, %v349
    %v351 = vmul.f32 %v348, %v350
    %v352 = vadd.f32 %v348, %v351
    %vm353 = vweird.f32 %v347
    %vm354 = vweird.f32 %v348
    %vm355 = vmor %vm353, %vm354
    %v356 = vsel %vm355, %v348, %v352
    %v357 = vand.u32 2147483647, %v347
    %vm358 = vcmp.eq.f32.partialorder %v357, 8.507059e+37
    %v359 = vand.u32 %v347, 2147483648
    %v360 = vor.u32 1.1754944e-38, %v359
    %v361 = vsel %vm358, %v360, %v356
    %v362 = vmul.f32 1.0, %v361
    %v363 = vtanh.pop %v341
    %v364 = vxor.u32 %v341, 2147483648
    %v365 = vmul.f32 %v364, 1.442695
    %v366 = vpow.pop %v365
    %v367 = vadd.f32 %v366, 1.0
    %v368 = vrcp.pop %v367
    %v369 = vmul.f32 %v367, %v368
    %v370 = vsub.f32 1.0, %v369
    %v371 = vmul.f32 %v368, %v370
    %v372 = vadd.f32 %v368, %v371
    %vm373 = vweird.f32 %v367
    %vm374 = vweird.f32 %v368
    %vm375 = vmor %vm373, %vm374
    %v376 = vsel %vm375, %v368, %v372
    %v377 = vand.u32 2147483647, %v367
    %vm378 = vcmp.eq.f32.partialorder %v377, 8.507059e+37
    %v379 = vand.u32 %v367, 2147483648
    %v380 = vor.u32 1.1754944e-38, %v379
    %v381 = vsel %vm378, %v380, %v376
    %v382 = vmul.f32 1.0, %v381
    %v383 = vmul.f32 %v362, %v247
    %v384 = vmul.f32 %v362, %v363
    %386 = vrot.lane.b32.xlu0 %v384, 64
    %v387 = vpop.permute.xlu0 %386
    %v389 = vadd.f32 %v383, %v387
    %v390 = vtanh.pop %v389
    %v391 = vmul.f32 %v382, %v390
    %393 = vrot.lane.b32.xlu0 %v391, 64
    %v394 = vpop.permute.xlu0 %393
    %396 = vst.msk [vmem:[#allocation3 + $0x1] sm:$0x1] %vm254, %v394
    %v397 = vpack.c.bf16 %v391, %v391
    %v398 = vld [vmem:[%s3] sm:$0xff]
    %v399 = vld [vmem:[%s3 + $0x8] sm:$0xff]
    %v400 = vld [vmem:[%s3 + $0x10] sm:$0xff]
    %v401 = vld [vmem:[%s3 + $0x18] sm:$0xff]
    %v402 = vld [vmem:[%s3 + $0x20] sm:$0xff]
    %v403 = vld [vmem:[%s3 + $0x28] sm:$0xff]
    %v404 = vld [vmem:[%s3 + $0x30] sm:$0xff]
    %v405 = vld [vmem:[%s3 + $0x38] sm:$0xff]
    %s406 = scalar_lea.vmem [#allocation2], 2
    %v407 = vld [vmem:[%s406] ss:$8 sm:$0x3]
    %409 = vrot.lane.b32.xlu0 %v397, 64
    %v410 = vpop.permute.xlu0 %409
    %v419 = vunpack.c.l.b16 %v398
    %v420 = vunpack.c.h.b16 %v398
    %v421 = vunpack.c.l.b16 %v399
    %v422 = vunpack.c.h.b16 %v399
    %v423 = vunpack.c.l.b16 %v400
    %v424 = vunpack.c.h.b16 %v400
    %v425 = vunpack.c.l.b16 %v401
    %v426 = vunpack.c.h.b16 %v401
    %v427 = vunpack.c.l.b16 %v402
    %v428 = vunpack.c.h.b16 %v402
    %v429 = vunpack.c.l.b16 %v403
    %v430 = vunpack.c.h.b16 %v403
    %v431 = vunpack.c.l.b16 %v404
    %v432 = vunpack.c.h.b16 %v404
    %v433 = vunpack.c.l.b16 %v405
    %v434 = vunpack.c.h.b16 %v405
    %v435 = vpack.c.b16 %v421, %v419
    %v436 = vpack.c.b16 %v422, %v420
    %v437 = vpack.c.b16 %v425, %v423
    %v438 = vpack.c.b16 %v426, %v424
    %v439 = vpack.c.b16 %v429, %v427
    %v440 = vpack.c.b16 %v430, %v428
    %v441 = vpack.c.b16 %v433, %v431
    %v442 = vpack.c.b16 %v434, %v432
    %v452 = vperm.slane %v407, 0
    %v453 = vperm.slane %v407, 1
    %v457 = vsel %vm167, %v410, 0
    %459 = vmatpush.bf16.msra.mxu0 0
    %460 = vmatpush.bf16.msra.mxu0 0
    %461 = vmatpush.bf16.msra.mxu0 0
    %462 = vmatpush.bf16.msra.mxu0 0
    %463 = vmatpush.bf16.msra.mxu0 %v441
    %464 = vmatpush.bf16.msra.mxu0 %v439
    %465 = vmatpush.bf16.msra.mxu0 %v437
    %466 = vmatpush.bf16.msra.mxu0 %v435
    %467 = vmatmul.bf16.gmra.mxu0 %v457
    %v468 = vpop.f32.mrf.mxu0
    %v469 = vadd.f32 %v452, %v468
    %v470 = vpop.f32.mrf.mxu0
    %471 = vdwg.mxu0
    %472 = vmatpush.bf16.msra.mxu0 0
    %473 = vmatpush.bf16.msra.mxu0 0
    %474 = vmatpush.bf16.msra.mxu0 0
    %475 = vmatpush.bf16.msra.mxu0 0
    %476 = vmatpush.bf16.msra.mxu0 %v442
    %477 = vmatpush.bf16.msra.mxu0 %v440
    %478 = vmatpush.bf16.msra.mxu0 %v438
    %479 = vmatpush.bf16.msra.mxu0 %v436
    %480 = vmatmul.bf16.gmra.mxu0 %v457
    %v481 = vpop.f32.mrf.mxu0
    %v482 = vadd.f32 %v453, %v481
    %v483 = vpop.f32.mrf.mxu0
    %484 = vdwg.mxu0
    %v485 = vxor.u32 %v469, 2147483648
    %v486 = vmul.f32 %v485, 1.442695
    %v487 = vpow.pop %v486
    %v488 = vadd.f32 %v487, 1.0
    %v489 = vrcp.pop %v488
    %v490 = vmul.f32 %v488, %v489
    %v491 = vsub.f32 1.0, %v490
    %v492 = vmul.f32 %v489, %v491
    %v493 = vadd.f32 %v489, %v492
    %vm494 = vweird.f32 %v488
    %vm495 = vweird.f32 %v489
    %vm496 = vmor %vm494, %vm495
    %v497 = vsel %vm496, %v489, %v493
    %v498 = vand.u32 2147483647, %v488
    %vm499 = vcmp.eq.f32.partialorder %v498, 8.507059e+37
    %v500 = vand.u32 %v488, 2147483648
    %v501 = vor.u32 1.1754944e-38, %v500
    %v502 = vsel %vm499, %v501, %v497
    %v503 = vmul.f32 1.0, %v502
    %v504 = vtanh.pop %v482
    %v505 = vxor.u32 %v482, 2147483648
    %v506 = vmul.f32 %v505, 1.442695
    %v507 = vpow.pop %v506
    %v508 = vadd.f32 %v507, 1.0
    %v509 = vrcp.pop %v508
    %v510 = vmul.f32 %v508, %v509
    %v511 = vsub.f32 1.0, %v510
    %v512 = vmul.f32 %v509, %v511
    %v513 = vadd.f32 %v509, %v512
    %vm514 = vweird.f32 %v508
    %vm515 = vweird.f32 %v509
    %vm516 = vmor %vm514, %vm515
    %v517 = vsel %vm516, %v509, %v513
    %v518 = vand.u32 2147483647, %v508
    %vm519 = vcmp.eq.f32.partialorder %v518, 8.507059e+37
    %v520 = vand.u32 %v508, 2147483648
    %v521 = vor.u32 1.1754944e-38, %v520
    %v522 = vsel %vm519, %v521, %v517
    %v523 = vmul.f32 1.0, %v522
    %v524 = vmul.f32 %v503, %v389
    %v525 = vmul.f32 %v503, %v504
    %527 = vrot.lane.b32.xlu0 %v525, 64
    %v528 = vpop.permute.xlu0 %527
    %v530 = vadd.f32 %v524, %v528
    %v531 = vtanh.pop %v530
    %v532 = vmul.f32 %v523, %v531
    %534 = vrot.lane.b32.xlu0 %v532, 64
    %v535 = vpop.permute.xlu0 %534
    %537 = vst.msk [vmem:[#allocation3 + $0x2] sm:$0x1] %vm254, %v535
    %v538 = vpack.c.bf16 %v532, %v532
    %v539 = vld [vmem:[%s3] sm:$0xff]
    %v540 = vld [vmem:[%s3 + $0x8] sm:$0xff]
    %v541 = vld [vmem:[%s3 + $0x10] sm:$0xff]
    %v542 = vld [vmem:[%s3 + $0x18] sm:$0xff]
    %v543 = vld [vmem:[%s3 + $0x20] sm:$0xff]
    %v544 = vld [vmem:[%s3 + $0x28] sm:$0xff]
    %v545 = vld [vmem:[%s3 + $0x30] sm:$0xff]
    %v546 = vld [vmem:[%s3 + $0x38] sm:$0xff]
    %s547 = scalar_lea.vmem [#allocation2], 3
    %v548 = vld [vmem:[%s547] ss:$8 sm:$0x3]
    %550 = vrot.lane.b32.xlu0 %v538, 64
    %v551 = vpop.permute.xlu0 %550
    %v560 = vunpack.c.l.b16 %v539
    %v561 = vunpack.c.h.b16 %v539
    %v562 = vunpack.c.l.b16 %v540
    %v563 = vunpack.c.h.b16 %v540
    %v564 = vunpack.c.l.b16 %v541
    %v565 = vunpack.c.h.b16 %v541
    %v566 = vunpack.c.l.b16 %v542
    %v567 = vunpack.c.h.b16 %v542
    %v568 = vunpack.c.l.b16 %v543
    %v569 = vunpack.c.h.b16 %v543
    %v570 = vunpack.c.l.b16 %v544
    %v571 = vunpack.c.h.b16 %v544
    %v572 = vunpack.c.l.b16 %v545
    %v573 = vunpack.c.h.b16 %v545
    %v574 = vunpack.c.l.b16 %v546
    %v575 = vunpack.c.h.b16 %v546
    %v576 = vpack.c.b16 %v562, %v560
    %v577 = vpack.c.b16 %v563, %v561
    %v578 = vpack.c.b16 %v566, %v564
    %v579 = vpack.c.b16 %v567, %v565
    %v580 = vpack.c.b16 %v570, %v568
    %v581 = vpack.c.b16 %v571, %v569
    %v582 = vpack.c.b16 %v574, %v572
    %v583 = vpack.c.b16 %v575, %v573
    %v593 = vperm.slane %v548, 0
    %v594 = vperm.slane %v548, 1
    %v598 = vsel %vm167, %v551, 0
    %600 = vmatpush.bf16.msra.mxu0 0
    %601 = vmatpush.bf16.msra.mxu0 0
    %602 = vmatpush.bf16.msra.mxu0 0
    %603 = vmatpush.bf16.msra.mxu0 0
    %604 = vmatpush.bf16.msra.mxu0 %v582
    %605 = vmatpush.bf16.msra.mxu0 %v580
    %606 = vmatpush.bf16.msra.mxu0 %v578
    %607 = vmatpush.bf16.msra.mxu0 %v576
    %608 = vmatmul.bf16.gmra.mxu0 %v598
    %v609 = vpop.f32.mrf.mxu0
    %v610 = vadd.f32 %v593, %v609
    %v611 = vpop.f32.mrf.mxu0
    %612 = vdwg.mxu0
    %613 = vmatpush.bf16.msra.mxu0 0
    %614 = vmatpush.bf16.msra.mxu0 0
    %615 = vmatpush.bf16.msra.mxu0 0
    %616 = vmatpush.bf16.msra.mxu0 0
    %617 = vmatpush.bf16.msra.mxu0 %v583
    %618 = vmatpush.bf16.msra.mxu0 %v581
    %619 = vmatpush.bf16.msra.mxu0 %v579
    %620 = vmatpush.bf16.msra.mxu0 %v577
    %621 = vmatmul.bf16.gmra.mxu0 %v598
    %v622 = vpop.f32.mrf.mxu0
    %v623 = vadd.f32 %v594, %v622
    %v624 = vpop.f32.mrf.mxu0
    %625 = vdwg.mxu0
    %v626 = vxor.u32 %v610, 2147483648
    %v627 = vmul.f32 %v626, 1.442695
    %v628 = vpow.pop %v627
    %v629 = vadd.f32 %v628, 1.0
    %v630 = vrcp.pop %v629
    %v631 = vmul.f32 %v629, %v630
    %v632 = vsub.f32 1.0, %v631
    %v633 = vmul.f32 %v630, %v632
    %v634 = vadd.f32 %v630, %v633
    %vm635 = vweird.f32 %v629
    %vm636 = vweird.f32 %v630
    %vm637 = vmor %vm635, %vm636
    %v638 = vsel %vm637, %v630, %v634
    %v639 = vand.u32 2147483647, %v629
    %vm640 = vcmp.eq.f32.partialorder %v639, 8.507059e+37
    %v641 = vand.u32 %v629, 2147483648
    %v642 = vor.u32 1.1754944e-38, %v641
    %v643 = vsel %vm640, %v642, %v638
    %v644 = vmul.f32 1.0, %v643
    %v645 = vtanh.pop %v623
    %v646 = vxor.u32 %v623, 2147483648
    %v647 = vmul.f32 %v646, 1.442695
    %v648 = vpow.pop %v647
    %v649 = vadd.f32 %v648, 1.0
    %v650 = vrcp.pop %v649
    %v651 = vmul.f32 %v649, %v650
    %v652 = vsub.f32 1.0, %v651
    %v653 = vmul.f32 %v650, %v652
    %v654 = vadd.f32 %v650, %v653
    %vm655 = vweird.f32 %v649
    %vm656 = vweird.f32 %v650
    %vm657 = vmor %vm655, %vm656
    %v658 = vsel %vm657, %v650, %v654
    %v659 = vand.u32 2147483647, %v649
    %vm660 = vcmp.eq.f32.partialorder %v659, 8.507059e+37
    %v661 = vand.u32 %v649, 2147483648
    %v662 = vor.u32 1.1754944e-38, %v661
    %v663 = vsel %vm660, %v662, %v658
    %v664 = vmul.f32 1.0, %v663
    %v665 = vmul.f32 %v644, %v530
    %v666 = vmul.f32 %v644, %v645
    %668 = vrot.lane.b32.xlu0 %v666, 64
    %v669 = vpop.permute.xlu0 %668
    %v671 = vadd.f32 %v665, %v669
    %v672 = vtanh.pop %v671
    %v673 = vmul.f32 %v664, %v672
    %675 = vrot.lane.b32.xlu0 %v673, 64
    %v676 = vpop.permute.xlu0 %675
    %678 = vst.msk [vmem:[#allocation3 + $0x3] sm:$0x1] %vm254, %v676
    %v679 = vpack.c.bf16 %v673, %v673
    %v680 = vld [vmem:[%s3] sm:$0xff]
    %v681 = vld [vmem:[%s3 + $0x8] sm:$0xff]
    %v682 = vld [vmem:[%s3 + $0x10] sm:$0xff]
    %v683 = vld [vmem:[%s3 + $0x18] sm:$0xff]
    %v684 = vld [vmem:[%s3 + $0x20] sm:$0xff]
    %v685 = vld [vmem:[%s3 + $0x28] sm:$0xff]
    %v686 = vld [vmem:[%s3 + $0x30] sm:$0xff]
    %v687 = vld [vmem:[%s3 + $0x38] sm:$0xff]
    %s688 = scalar_lea.vmem [#allocation2], 4
    %v689 = vld [vmem:[%s688] ss:$8 sm:$0x3]
    %691 = vrot.lane.b32.xlu0 %v679, 64
    %v692 = vpop.permute.xlu0 %691
    %v701 = vunpack.c.l.b16 %v680
    %v702 = vunpack.c.h.b16 %v680
    %v703 = vunpack.c.l.b16 %v681
    %v704 = vunpack.c.h.b16 %v681
    %v705 = vunpack.c.l.b16 %v682
    %v706 = vunpack.c.h.b16 %v682
    %v707 = vunpack.c.l.b16 %v683
    %v708 = vunpack.c.h.b16 %v683
    %v709 = vunpack.c.l.b16 %v684
    %v710 = vunpack.c.h.b16 %v684
    %v711 = vunpack.c.l.b16 %v685
    %v712 = vunpack.c.h.b16 %v685
    %v713 = vunpack.c.l.b16 %v686
    %v714 = vunpack.c.h.b16 %v686
    %v715 = vunpack.c.l.b16 %v687
    %v716 = vunpack.c.h.b16 %v687
    %v717 = vpack.c.b16 %v703, %v701
    %v718 = vpack.c.b16 %v704, %v702
    %v719 = vpack.c.b16 %v707, %v705
    %v720 = vpack.c.b16 %v708, %v706
    %v721 = vpack.c.b16 %v711, %v709
    %v722 = vpack.c.b16 %v712, %v710
    %v723 = vpack.c.b16 %v715, %v713
    %v724 = vpack.c.b16 %v716, %v714
    %v734 = vperm.slane %v689, 0
    %v735 = vperm.slane %v689, 1
    %v739 = vsel %vm167, %v692, 0
    %741 = vmatpush.bf16.msra.mxu0 0
    %742 = vmatpush.bf16.msra.mxu0 0
    %743 = vmatpush.bf16.msra.mxu0 0
    %744 = vmatpush.bf16.msra.mxu0 0
    %745 = vmatpush.bf16.msra.mxu0 %v723
    %746 = vmatpush.bf16.msra.mxu0 %v721
    %747 = vmatpush.bf16.msra.mxu0 %v719
    %748 = vmatpush.bf16.msra.mxu0 %v717
    %749 = vmatmul.bf16.gmra.mxu0 %v739
    %v750 = vpop.f32.mrf.mxu0
    %v751 = vadd.f32 %v734, %v750
    %v752 = vpop.f32.mrf.mxu0
    %753 = vdwg.mxu0
    %754 = vmatpush.bf16.msra.mxu0 0
    %755 = vmatpush.bf16.msra.mxu0 0
    %756 = vmatpush.bf16.msra.mxu0 0
    %757 = vmatpush.bf16.msra.mxu0 0
    %758 = vmatpush.bf16.msra.mxu0 %v724
    %759 = vmatpush.bf16.msra.mxu0 %v722
    %760 = vmatpush.bf16.msra.mxu0 %v720
    %761 = vmatpush.bf16.msra.mxu0 %v718
    %762 = vmatmul.bf16.gmra.mxu0 %v739
    %v763 = vpop.f32.mrf.mxu0
    %v764 = vadd.f32 %v735, %v763
    %v765 = vpop.f32.mrf.mxu0
    %766 = vdwg.mxu0
    %v767 = vxor.u32 %v751, 2147483648
    %v768 = vmul.f32 %v767, 1.442695
    %v769 = vpow.pop %v768
    %v770 = vadd.f32 %v769, 1.0
    %v771 = vrcp.pop %v770
    %v772 = vmul.f32 %v770, %v771
    %v773 = vsub.f32 1.0, %v772
    %v774 = vmul.f32 %v771, %v773
    %v775 = vadd.f32 %v771, %v774
    %vm776 = vweird.f32 %v770
    %vm777 = vweird.f32 %v771
    %vm778 = vmor %vm776, %vm777
    %v779 = vsel %vm778, %v771, %v775
    %v780 = vand.u32 2147483647, %v770
    %vm781 = vcmp.eq.f32.partialorder %v780, 8.507059e+37
    %v782 = vand.u32 %v770, 2147483648
    %v783 = vor.u32 1.1754944e-38, %v782
    %v784 = vsel %vm781, %v783, %v779
    %v785 = vmul.f32 1.0, %v784
    %v786 = vtanh.pop %v764
    %v787 = vxor.u32 %v764, 2147483648
    %v788 = vmul.f32 %v787, 1.442695
    %v789 = vpow.pop %v788
    %v790 = vadd.f32 %v789, 1.0
    %v791 = vrcp.pop %v790
    %v792 = vmul.f32 %v790, %v791
    %v793 = vsub.f32 1.0, %v792
    %v794 = vmul.f32 %v791, %v793
    %v795 = vadd.f32 %v791, %v794
    %vm796 = vweird.f32 %v790
    %vm797 = vweird.f32 %v791
    %vm798 = vmor %vm796, %vm797
    %v799 = vsel %vm798, %v791, %v795
    %v800 = vand.u32 2147483647, %v790
    %vm801 = vcmp.eq.f32.partialorder %v800, 8.507059e+37
    %v802 = vand.u32 %v790, 2147483648
    %v803 = vor.u32 1.1754944e-38, %v802
    %v804 = vsel %vm801, %v803, %v799
    %v805 = vmul.f32 1.0, %v804
    %v806 = vmul.f32 %v785, %v671
    %v807 = vmul.f32 %v785, %v786
    %809 = vrot.lane.b32.xlu0 %v807, 64
    %v810 = vpop.permute.xlu0 %809
    %v812 = vadd.f32 %v806, %v810
    %v813 = vtanh.pop %v812
    %v814 = vmul.f32 %v805, %v813
    %816 = vrot.lane.b32.xlu0 %v814, 64
    %v817 = vpop.permute.xlu0 %816
    %819 = vst.msk [vmem:[#allocation3 + $0x4] sm:$0x1] %vm254, %v817
    %v820 = vpack.c.bf16 %v814, %v814
    %v821 = vld [vmem:[%s3] sm:$0xff]
    %v822 = vld [vmem:[%s3 + $0x8] sm:$0xff]
    %v823 = vld [vmem:[%s3 + $0x10] sm:$0xff]
    %v824 = vld [vmem:[%s3 + $0x18] sm:$0xff]
    %v825 = vld [vmem:[%s3 + $0x20] sm:$0xff]
    %v826 = vld [vmem:[%s3 + $0x28] sm:$0xff]
    %v827 = vld [vmem:[%s3 + $0x30] sm:$0xff]
    %v828 = vld [vmem:[%s3 + $0x38] sm:$0xff]
    %s829 = scalar_lea.vmem [#allocation2], 5
    %v830 = vld [vmem:[%s829] ss:$8 sm:$0x3]
    %832 = vrot.lane.b32.xlu0 %v820, 64
    %v833 = vpop.permute.xlu0 %832
    %v842 = vunpack.c.l.b16 %v821
    %v843 = vunpack.c.h.b16 %v821
    %v844 = vunpack.c.l.b16 %v822
    %v845 = vunpack.c.h.b16 %v822
    %v846 = vunpack.c.l.b16 %v823
    %v847 = vunpack.c.h.b16 %v823
    %v848 = vunpack.c.l.b16 %v824
    %v849 = vunpack.c.h.b16 %v824
    %v850 = vunpack.c.l.b16 %v825
    %v851 = vunpack.c.h.b16 %v825
    %v852 = vunpack.c.l.b16 %v826
    %v853 = vunpack.c.h.b16 %v826
    %v854 = vunpack.c.l.b16 %v827
    %v855 = vunpack.c.h.b16 %v827
    %v856 = vunpack.c.l.b16 %v828
    %v857 = vunpack.c.h.b16 %v828
    %v858 = vpack.c.b16 %v844, %v842
    %v859 = vpack.c.b16 %v845, %v843
    %v860 = vpack.c.b16 %v848, %v846
    %v861 = vpack.c.b16 %v849, %v847
    %v862 = vpack.c.b16 %v852, %v850
    %v863 = vpack.c.b16 %v853, %v851
    %v864 = vpack.c.b16 %v856, %v854
    %v865 = vpack.c.b16 %v857, %v855
    %v875 = vperm.slane %v830, 0
    %v876 = vperm.slane %v830, 1
    %v880 = vsel %vm167, %v833, 0
    %882 = vmatpush.bf16.msra.mxu0 0
    %883 = vmatpush.bf16.msra.mxu0 0
    %884 = vmatpush.bf16.msra.mxu0 0
    %885 = vmatpush.bf16.msra.mxu0 0
    %886 = vmatpush.bf16.msra.mxu0 %v864
    %887 = vmatpush.bf16.msra.mxu0 %v862
    %888 = vmatpush.bf16.msra.mxu0 %v860
    %889 = vmatpush.bf16.msra.mxu0 %v858
    %890 = vmatmul.bf16.gmra.mxu0 %v880
    %v891 = vpop.f32.mrf.mxu0
    %v892 = vadd.f32 %v875, %v891
    %v893 = vpop.f32.mrf.mxu0
    %894 = vdwg.mxu0
    %895 = vmatpush.bf16.msra.mxu0 0
    %896 = vmatpush.bf16.msra.mxu0 0
    %897 = vmatpush.bf16.msra.mxu0 0
    %898 = vmatpush.bf16.msra.mxu0 0
    %899 = vmatpush.bf16.msra.mxu0 %v865
    %900 = vmatpush.bf16.msra.mxu0 %v863
    %901 = vmatpush.bf16.msra.mxu0 %v861
    %902 = vmatpush.bf16.msra.mxu0 %v859
    %903 = vmatmul.bf16.gmra.mxu0 %v880
    %v904 = vpop.f32.mrf.mxu0
    %v905 = vadd.f32 %v876, %v904
    %v906 = vpop.f32.mrf.mxu0
    %907 = vdwg.mxu0
    %v908 = vxor.u32 %v892, 2147483648
    %v909 = vmul.f32 %v908, 1.442695
    %v910 = vpow.pop %v909
    %v911 = vadd.f32 %v910, 1.0
    %v912 = vrcp.pop %v911
    %v913 = vmul.f32 %v911, %v912
    %v914 = vsub.f32 1.0, %v913
    %v915 = vmul.f32 %v912, %v914
    %v916 = vadd.f32 %v912, %v915
    %vm917 = vweird.f32 %v911
    %vm918 = vweird.f32 %v912
    %vm919 = vmor %vm917, %vm918
    %v920 = vsel %vm919, %v912, %v916
    %v921 = vand.u32 2147483647, %v911
    %vm922 = vcmp.eq.f32.partialorder %v921, 8.507059e+37
    %v923 = vand.u32 %v911, 2147483648
    %v924 = vor.u32 1.1754944e-38, %v923
    %v925 = vsel %vm922, %v924, %v920
    %v926 = vmul.f32 1.0, %v925
    %v927 = vtanh.pop %v905
    %v928 = vxor.u32 %v905, 2147483648
    %v929 = vmul.f32 %v928, 1.442695
    %v930 = vpow.pop %v929
    %v931 = vadd.f32 %v930, 1.0
    %v932 = vrcp.pop %v931
    %v933 = vmul.f32 %v931, %v932
    %v934 = vsub.f32 1.0, %v933
    %v935 = vmul.f32 %v932, %v934
    %v936 = vadd.f32 %v932, %v935
    %vm937 = vweird.f32 %v931
    %vm938 = vweird.f32 %v932
    %vm939 = vmor %vm937, %vm938
    %v940 = vsel %vm939, %v932, %v936
    %v941 = vand.u32 2147483647, %v931
    %vm942 = vcmp.eq.f32.partialorder %v941, 8.507059e+37
    %v943 = vand.u32 %v931, 2147483648
    %v944 = vor.u32 1.1754944e-38, %v943
    %v945 = vsel %vm942, %v944, %v940
    %v946 = vmul.f32 1.0, %v945
    %v947 = vmul.f32 %v926, %v812
    %v948 = vmul.f32 %v926, %v927
    %950 = vrot.lane.b32.xlu0 %v948, 64
    %v951 = vpop.permute.xlu0 %950
    %v953 = vadd.f32 %v947, %v951
    %v954 = vtanh.pop %v953
    %v955 = vmul.f32 %v946, %v954
    %957 = vrot.lane.b32.xlu0 %v955, 64
    %v958 = vpop.permute.xlu0 %957
    %960 = vst.msk [vmem:[#allocation3 + $0x5] sm:$0x1] %vm254, %v958
    %v961 = vpack.c.bf16 %v955, %v955
    %v962 = vld [vmem:[%s3] sm:$0xff]
    %v963 = vld [vmem:[%s3 + $0x8] sm:$0xff]
    %v964 = vld [vmem:[%s3 + $0x10] sm:$0xff]
    %v965 = vld [vmem:[%s3 + $0x18] sm:$0xff]
    %v966 = vld [vmem:[%s3 + $0x20] sm:$0xff]
    %v967 = vld [vmem:[%s3 + $0x28] sm:$0xff]
    %v968 = vld [vmem:[%s3 + $0x30] sm:$0xff]
    %v969 = vld [vmem:[%s3 + $0x38] sm:$0xff]
    %s970 = scalar_lea.vmem [#allocation2], 6
    %v971 = vld [vmem:[%s970] ss:$8 sm:$0x3]
    %973 = vrot.lane.b32.xlu0 %v961, 64
    %v974 = vpop.permute.xlu0 %973
    %v983 = vunpack.c.l.b16 %v962
    %v984 = vunpack.c.h.b16 %v962
    %v985 = vunpack.c.l.b16 %v963
    %v986 = vunpack.c.h.b16 %v963
    %v987 = vunpack.c.l.b16 %v964
    %v988 = vunpack.c.h.b16 %v964
    %v989 = vunpack.c.l.b16 %v965
    %v990 = vunpack.c.h.b16 %v965
    %v991 = vunpack.c.l.b16 %v966
    %v992 = vunpack.c.h.b16 %v966
    %v993 = vunpack.c.l.b16 %v967
    %v994 = vunpack.c.h.b16 %v967
    %v995 = vunpack.c.l.b16 %v968
    %v996 = vunpack.c.h.b16 %v968
    %v997 = vunpack.c.l.b16 %v969
    %v998 = vunpack.c.h.b16 %v969
    %v999 = vpack.c.b16 %v985, %v983
    %v1000 = vpack.c.b16 %v986, %v984
    %v1001 = vpack.c.b16 %v989, %v987
    %v1002 = vpack.c.b16 %v990, %v988
    %v1003 = vpack.c.b16 %v993, %v991
    %v1004 = vpack.c.b16 %v994, %v992
    %v1005 = vpack.c.b16 %v997, %v995
    %v1006 = vpack.c.b16 %v998, %v996
    %v1016 = vperm.slane %v971, 0
    %v1017 = vperm.slane %v971, 1
    %v1021 = vsel %vm167, %v974, 0
    %1023 = vmatpush.bf16.msra.mxu0 0
    %1024 = vmatpush.bf16.msra.mxu0 0
    %1025 = vmatpush.bf16.msra.mxu0 0
    %1026 = vmatpush.bf16.msra.mxu0 0
    %1027 = vmatpush.bf16.msra.mxu0 %v1005
    %1028 = vmatpush.bf16.msra.mxu0 %v1003
    %1029 = vmatpush.bf16.msra.mxu0 %v1001
    %1030 = vmatpush.bf16.msra.mxu0 %v999
    %1031 = vmatmul.bf16.gmra.mxu0 %v1021
    %v1032 = vpop.f32.mrf.mxu0
    %v1033 = vadd.f32 %v1016, %v1032
    %v1034 = vpop.f32.mrf.mxu0
    %1035 = vdwg.mxu0
    %1036 = vmatpush.bf16.msra.mxu0 0
    %1037 = vmatpush.bf16.msra.mxu0 0
    %1038 = vmatpush.bf16.msra.mxu0 0
    %1039 = vmatpush.bf16.msra.mxu0 0
    %1040 = vmatpush.bf16.msra.mxu0 %v1006
    %1041 = vmatpush.bf16.msra.mxu0 %v1004
    %1042 = vmatpush.bf16.msra.mxu0 %v1002
    %1043 = vmatpush.bf16.msra.mxu0 %v1000
    %1044 = vmatmul.bf16.gmra.mxu0 %v1021
    %v1045 = vpop.f32.mrf.mxu0
    %v1046 = vadd.f32 %v1017, %v1045
    %v1047 = vpop.f32.mrf.mxu0
    %1048 = vdwg.mxu0
    %v1049 = vxor.u32 %v1033, 2147483648
    %v1050 = vmul.f32 %v1049, 1.442695
    %v1051 = vpow.pop %v1050
    %v1052 = vadd.f32 %v1051, 1.0
    %v1053 = vrcp.pop %v1052
    %v1054 = vmul.f32 %v1052, %v1053
    %v1055 = vsub.f32 1.0, %v1054
    %v1056 = vmul.f32 %v1053, %v1055
    %v1057 = vadd.f32 %v1053, %v1056
    %vm1058 = vweird.f32 %v1052
    %vm1059 = vweird.f32 %v1053
    %vm1060 = vmor %vm1058, %vm1059
    %v1061 = vsel %vm1060, %v1053, %v1057
    %v1062 = vand.u32 2147483647, %v1052
    %vm1063 = vcmp.eq.f32.partialorder %v1062, 8.507059e+37
    %v1064 = vand.u32 %v1052, 2147483648
    %v1065 = vor.u32 1.1754944e-38, %v1064
    %v1066 = vsel %vm1063, %v1065, %v1061
    %v1067 = vmul.f32 1.0, %v1066
    %v1068 = vtanh.pop %v1046
    %v1069 = vxor.u32 %v1046, 2147483648
    %v1070 = vmul.f32 %v1069, 1.442695
    %v1071 = vpow.pop %v1070
    %v1072 = vadd.f32 %v1071, 1.0
    %v1073 = vrcp.pop %v1072
    %v1074 = vmul.f32 %v1072, %v1073
    %v1075 = vsub.f32 1.0, %v1074
    %v1076 = vmul.f32 %v1073, %v1075
    %v1077 = vadd.f32 %v1073, %v1076
    %vm1078 = vweird.f32 %v1072
    %vm1079 = vweird.f32 %v1073
    %vm1080 = vmor %vm1078, %vm1079
    %v1081 = vsel %vm1080, %v1073, %v1077
    %v1082 = vand.u32 2147483647, %v1072
    %vm1083 = vcmp.eq.f32.partialorder %v1082, 8.507059e+37
    %v1084 = vand.u32 %v1072, 2147483648
    %v1085 = vor.u32 1.1754944e-38, %v1084
    %v1086 = vsel %vm1083, %v1085, %v1081
    %v1087 = vmul.f32 1.0, %v1086
    %v1088 = vmul.f32 %v1067, %v953
    %v1089 = vmul.f32 %v1067, %v1068
    %1091 = vrot.lane.b32.xlu0 %v1089, 64
    %v1092 = vpop.permute.xlu0 %1091
    %v1094 = vadd.f32 %v1088, %v1092
    %v1095 = vtanh.pop %v1094
    %v1096 = vmul.f32 %v1087, %v1095
    %1098 = vrot.lane.b32.xlu0 %v1096, 64
    %v1099 = vpop.permute.xlu0 %1098
    %1101 = vst.msk [vmem:[#allocation3 + $0x6] sm:$0x1] %vm254, %v1099
    %v1102 = vpack.c.bf16 %v1096, %v1096
    %v1103 = vld [vmem:[%s3] sm:$0xff]
    %v1104 = vld [vmem:[%s3 + $0x8] sm:$0xff]
    %v1105 = vld [vmem:[%s3 + $0x10] sm:$0xff]
    %v1106 = vld [vmem:[%s3 + $0x18] sm:$0xff]
    %v1107 = vld [vmem:[%s3 + $0x20] sm:$0xff]
    %v1108 = vld [vmem:[%s3 + $0x28] sm:$0xff]
    %v1109 = vld [vmem:[%s3 + $0x30] sm:$0xff]
    %v1110 = vld [vmem:[%s3 + $0x38] sm:$0xff]
    %s1111 = scalar_lea.vmem [#allocation2], 7
    %v1112 = vld [vmem:[%s1111] ss:$8 sm:$0x3]
    %1114 = vrot.lane.b32.xlu0 %v1102, 64
    %v1115 = vpop.permute.xlu0 %1114
    %v1124 = vunpack.c.l.b16 %v1103
    %v1125 = vunpack.c.h.b16 %v1103
    %v1126 = vunpack.c.l.b16 %v1104
    %v1127 = vunpack.c.h.b16 %v1104
    %v1128 = vunpack.c.l.b16 %v1105
    %v1129 = vunpack.c.h.b16 %v1105
    %v1130 = vunpack.c.l.b16 %v1106
    %v1131 = vunpack.c.h.b16 %v1106
    %v1132 = vunpack.c.l.b16 %v1107
    %v1133 = vunpack.c.h.b16 %v1107
    %v1134 = vunpack.c.l.b16 %v1108
    %v1135 = vunpack.c.h.b16 %v1108
    %v1136 = vunpack.c.l.b16 %v1109
    %v1137 = vunpack.c.h.b16 %v1109
    %v1138 = vunpack.c.l.b16 %v1110
    %v1139 = vunpack.c.h.b16 %v1110
    %v1140 = vpack.c.b16 %v1126, %v1124
    %v1141 = vpack.c.b16 %v1127, %v1125
    %v1142 = vpack.c.b16 %v1130, %v1128
    %v1143 = vpack.c.b16 %v1131, %v1129
    %v1144 = vpack.c.b16 %v1134, %v1132
    %v1145 = vpack.c.b16 %v1135, %v1133
    %v1146 = vpack.c.b16 %v1138, %v1136
    %v1147 = vpack.c.b16 %v1139, %v1137
    %v1157 = vperm.slane %v1112, 0
    %v1158 = vperm.slane %v1112, 1
    %v1162 = vsel %vm167, %v1115, 0
    %1164 = vmatpush.bf16.msra.mxu0 0
    %1165 = vmatpush.bf16.msra.mxu0 0
    %1166 = vmatpush.bf16.msra.mxu0 0
    %1167 = vmatpush.bf16.msra.mxu0 0
    %1168 = vmatpush.bf16.msra.mxu0 %v1146
    %1169 = vmatpush.bf16.msra.mxu0 %v1144
    %1170 = vmatpush.bf16.msra.mxu0 %v1142
    %1171 = vmatpush.bf16.msra.mxu0 %v1140
    %1172 = vmatmul.bf16.gmra.mxu0 %v1162
    %v1173 = vpop.f32.mrf.mxu0
    %v1174 = vadd.f32 %v1157, %v1173
    %v1175 = vpop.f32.mrf.mxu0
    %1176 = vdwg.mxu0
    %1177 = vmatpush.bf16.msra.mxu0 0
    %1178 = vmatpush.bf16.msra.mxu0 0
    %1179 = vmatpush.bf16.msra.mxu0 0
    %1180 = vmatpush.bf16.msra.mxu0 0
    %1181 = vmatpush.bf16.msra.mxu0 %v1147
    %1182 = vmatpush.bf16.msra.mxu0 %v1145
    %1183 = vmatpush.bf16.msra.mxu0 %v1143
    %1184 = vmatpush.bf16.msra.mxu0 %v1141
    %1185 = vmatmul.bf16.gmra.mxu0 %v1162
    %v1186 = vpop.f32.mrf.mxu0
    %v1187 = vadd.f32 %v1158, %v1186
    %v1188 = vpop.f32.mrf.mxu0
    %1189 = vdwg.mxu0
    %v1190 = vxor.u32 %v1174, 2147483648
    %v1191 = vmul.f32 %v1190, 1.442695
    %v1192 = vpow.pop %v1191
    %v1193 = vadd.f32 %v1192, 1.0
    %v1194 = vrcp.pop %v1193
    %v1195 = vmul.f32 %v1193, %v1194
    %v1196 = vsub.f32 1.0, %v1195
    %v1197 = vmul.f32 %v1194, %v1196
    %v1198 = vadd.f32 %v1194, %v1197
    %vm1199 = vweird.f32 %v1193
    %vm1200 = vweird.f32 %v1194
    %vm1201 = vmor %vm1199, %vm1200
    %v1202 = vsel %vm1201, %v1194, %v1198
    %v1203 = vand.u32 2147483647, %v1193
    %vm1204 = vcmp.eq.f32.partialorder %v1203, 8.507059e+37
    %v1205 = vand.u32 %v1193, 2147483648
    %v1206 = vor.u32 1.1754944e-38, %v1205
    %v1207 = vsel %vm1204, %v1206, %v1202
    %v1208 = vmul.f32 1.0, %v1207
    %v1209 = vtanh.pop %v1187
    %v1210 = vxor.u32 %v1187, 2147483648
    %v1211 = vmul.f32 %v1210, 1.442695
    %v1212 = vpow.pop %v1211
    %v1213 = vadd.f32 %v1212, 1.0
    %v1214 = vrcp.pop %v1213
    %v1215 = vmul.f32 %v1213, %v1214
    %v1216 = vsub.f32 1.0, %v1215
    %v1217 = vmul.f32 %v1214, %v1216
    %v1218 = vadd.f32 %v1214, %v1217
    %vm1219 = vweird.f32 %v1213
    %vm1220 = vweird.f32 %v1214
    %vm1221 = vmor %vm1219, %vm1220
    %v1222 = vsel %vm1221, %v1214, %v1218
    %v1223 = vand.u32 2147483647, %v1213
    %vm1224 = vcmp.eq.f32.partialorder %v1223, 8.507059e+37
    %v1225 = vand.u32 %v1213, 2147483648
    %v1226 = vor.u32 1.1754944e-38, %v1225
    %v1227 = vsel %vm1224, %v1226, %v1222
    %v1228 = vmul.f32 1.0, %v1227
    %v1229 = vmul.f32 %v1208, %v1094
    %v1230 = vmul.f32 %v1208, %v1209
    %1232 = vrot.lane.b32.xlu0 %v1230, 64
    %v1233 = vpop.permute.xlu0 %1232
    %v1235 = vadd.f32 %v1229, %v1233
    %v1236 = vtanh.pop %v1235
    %v1237 = vmul.f32 %v1228, %v1236
    %1239 = vrot.lane.b32.xlu0 %v1237, 64
    %v1240 = vpop.permute.xlu0 %1239
    %1242 = vst.msk [vmem:[#allocation3 + $0x7] sm:$0x1] %vm254, %v1240
    %v1243 = vlaneseq
    %v1244 = vshrl.u32 %v1243, 7
    %v1245 = vlaneseq
    %v1246 = vand.u32 %v1245, 127
    %v1247 = vadd.s32 %v1244, %v1246
    %vm1248 = vcmp.eq.s32.totalorder %v1247, 7
    %v1249 = vsel %vm1248, 1, 0
    %v1250 = vcvt.s32.f32 %v1249
    %v1251 = vld [vmem:[#allocation3] sm:$0xff]
    %v1252 = vld [vmem:[%s6] sm:$0xff]
    %v1253 = vld [vmem:[%s6 + $0x8] sm:$0xff]
    %v1254 = vld [vmem:[%s6 + $0x10] sm:$0xff]
    %v1255 = vld [vmem:[%s6 + $0x18] sm:$0xff]
    %v1256 = vld [vmem:[%s6 + $0x20] sm:$0xff]
    %v1257 = vld [vmem:[%s6 + $0x28] sm:$0xff]
    %v1258 = vld [vmem:[%s6 + $0x30] sm:$0xff]
    %v1259 = vld [vmem:[%s6 + $0x38] sm:$0xff]
    %1261 = vrot.lane.b32.xlu0 %v1251, 96
    %v1262 = vpop.permute.xlu0 %1261
    %v1263 = vsel %vm78, %v1262, 0
    %1265 = vmatpush.msra.mxu0 0.0
    %1266 = vmatpush.msra.mxu0 0.0
    %1267 = vmatpush.msra.mxu0 0.0
    %1268 = vmatpush.msra.mxu0 0.0
    %1269 = vmatpush.msra.mxu0 0.0
    %1270 = vmatpush.msra.mxu0 0.0
    %1271 = vmatpush.msra.mxu0 0.0
    %1272 = vmatpush.msra.mxu0 0.0
    %1273 = vmatpush.msra.mxu0 0.0
    %1274 = vmatpush.msra.mxu0 0.0
    %1275 = vmatpush.msra.mxu0 0.0
    %1276 = vmatpush.msra.mxu0 0.0
    %1277 = vmatpush.msra.mxu0 %v1259
    %1278 = vmatpush.msra.mxu0 %v1258
    %1279 = vmatpush.msra.mxu0 %v1257
    %1280 = vmatpush.msra.mxu0 %v1256
    %1281 = vmatmul.f32.gmra.mxu0 %v1263
    %v1282 = vpop.f32.mrf.mxu0
    %v1283 = vadd.f32 0.0, %v1282
    %1284 = vdwg.mxu0
    %vm1285 = vcmask 64512
    %v1287 = vsel %vm1285, %v1250, 0
    %1289 = vmatpush.msra.mxu0 0.0
    %1290 = vmatpush.msra.mxu0 0.0
    %1291 = vmatpush.msra.mxu0 0.0
    %1292 = vmatpush.msra.mxu0 0.0
    %1293 = vmatpush.msra.mxu0 0.0
    %1294 = vmatpush.msra.mxu0 0.0
    %1295 = vmatpush.msra.mxu0 0.0
    %1296 = vmatpush.msra.mxu0 0.0
    %1297 = vmatpush.msra.mxu0 0.0
    %1298 = vmatpush.msra.mxu0 0.0
    %1299 = vmatpush.msra.mxu0 0.0
    %1300 = vmatpush.msra.mxu0 0.0
    %1301 = vmatpush.msra.mxu0 0.0
    %1302 = vmatpush.msra.mxu0 0.0
    %1303 = vmatpush.msra.mxu0 0.0
    %1304 = vmatpush.msra.mxu0 %v1283
    %1305 = vmatmul.f32.gmra.mxu0 %v1287
    %v1306 = vpop.f32.mrf.mxu0
    %v1307 = vadd.f32 0.0, %v1306
    %1308 = vdwg.mxu0
    %v1309 = vsel %vm78, %v1251, 0
    %1311 = vmatpush.msra.mxu0 0.0
    %1312 = vmatpush.msra.mxu0 0.0
    %1313 = vmatpush.msra.mxu0 0.0
    %1314 = vmatpush.msra.mxu0 0.0
    %1315 = vmatpush.msra.mxu0 0.0
    %1316 = vmatpush.msra.mxu0 0.0
    %1317 = vmatpush.msra.mxu0 0.0
    %1318 = vmatpush.msra.mxu0 0.0
    %1319 = vmatpush.msra.mxu0 0.0
    %1320 = vmatpush.msra.mxu0 0.0
    %1321 = vmatpush.msra.mxu0 0.0
    %1322 = vmatpush.msra.mxu0 0.0
    %1323 = vmatpush.msra.mxu0 %v1255
    %1324 = vmatpush.msra.mxu0 %v1254
    %1325 = vmatpush.msra.mxu0 %v1253
    %1326 = vmatpush.msra.mxu0 %v1252
    %1327 = vmatmul.f32.gmra.mxu0 %v1309
    %v1328 = vpop.f32.mrf.mxu0
    %v1329 = vadd.f32 %v1307, %v1328
    %1330 = vdwg.mxu0
    %v1331 = vld [vmem:[%s7] sm:$0x1]
    %v1333 = vperm.slane %v1331, 0
    %v1335 = vadd.f32 %v1329, %v1333
    %1336 = vst.msk [vmem:[#allocation7] sm:$0xff] %vm1285, %v1335
    // Predicated region
    $region38: #{bilstm_forward.1} parent=1 // pred_check
      _
    $region39: #{bilstm_forward.1} parent=1 // pred_check_branch
      %1338 = sbr.rel (0) target = $region41
    $region40: #{bilstm_forward.1} parent=1 // pred_region
      %1340 = vsyncadd [#allocation6], 0
      %s1342 = sshll.u32 [#allocation7], 4
      %s1343 = int_to_ptr.vmem [resolvable:$true] %s1342
      %s1344 = sshll.u32 %s8, 4
      %s1345 = int_to_ptr.hbm [resolvable:$true] %s1344
      %1347 = dma.vmem_to_hbm [thread:$0]  %s1343, 128, %s1345, [#allocation6]
    $region41: #{bilstm_forward.1} parent=1 // pred_fallthru
      _
    // Predicated region
    $region42: #{bilstm_forward.1} parent=1 // pred_check
      _
    $region43: #{bilstm_forward.1} parent=1 // pred_check_branch
      %1349 = sbr.rel (0) target = $region45
    $region44: #{bilstm_forward.1} parent=1 // pred_region
      %1351 = dma.done [#allocation6], 128
    $region45: #{bilstm_forward.1} parent=1 // pred_fallthru
      _
    %1352 = vsyncpa [#allocation5], 1
    %1353 = vsyncpa [#allocation6], 1

</llo_original>
